<compile_context>
chip_gen: v6e
topology: v6e:2x2x1
jax: 0.10.0
libtpu: 0.0.40
codegen_flags: <defaults>
</compile_context>

<pallas_src>
import jax
import jax.numpy as jnp
from jax.experimental import pallas as pl
from jax.experimental.pallas import tpu as pltpu


# ---------------------------------------------------------------------------
# Fused Pallas kernel: layer-0 projection + all LSTM layers + final Linear
# ---------------------------------------------------------------------------
def _make_fused_kernel(T, B_pad, H, num_layers):
    """Ref order:
      x_tm    (T*B_pad, D)  bf16   -- time-major, batch-padded input
      w_ih0_t (D, 4H)       bf16
      b0      (1, 4H)       f32    -- b_ih + b_hh, layer 0
      w_hh0_t (H, 4H)       bf16
      [w_ih_l_t (H,4H) bf16, w_hh_l_t (H,4H) bf16, b_l (1,4H) f32]  l = 1..L-1
      w_fc_t  (H, C_pad)    bf16
      b_fc    (1, C_pad)    f32
      out     (B_pad, C_pad) f32   -- lane-dense padded logits
      hseq    (T*B_pad, H)  bf16   -- VMEM scratch, inter-layer hidden sequence
    """

    def kernel(*refs):
        x_ref, wih0_ref, b0_ref, whh0_ref = refs[0:4]
        n_extra = 3 * (num_layers - 1)
        extra = refs[4:4 + n_extra]
        wfc_ref = refs[4 + n_extra]
        bfc_ref = refs[5 + n_extra]
        out_ref = refs[6 + n_extra]
        hseq_ref = refs[7 + n_extra]

        # Hoisted lane mask for the full-slab activation select (broadcasts are
        # not CSE'd by JAX -> build exactly once, reuse across layers/timesteps).
        lane = jax.lax.broadcasted_iota(jnp.int32, (B_pad, 4 * H), 1)
        is_g = jnp.logical_and(lane >= 2 * H, lane < 3 * H)

        def run_layer(gx, w_hh, store_seq):
            # gx: (T*B_pad, 4H) f32, time-major (rows [t*B_pad:(t+1)*B_pad] = step t),
            # input projection + fused bias already applied.
            h = jnp.zeros((B_pad, H), jnp.float32)
            c = jnp.zeros((B_pad, H), jnp.float32)
            for t in range(T):  # static unroll: T is tiny; all slices static/aligned
                gates = gx[t * B_pad:(t + 1) * B_pad, :] + jnp.dot(
                    h.astype(w_hh.dtype), w_hh,
                    preferred_element_type=jnp.float32)
                # PyTorch gate order along 4H lanes: [i | f | g | o].
                # Two full-vreg EUP passes + one VPU select instead of four
                # partial-vreg transcendental pushes per step.
                act = jnp.where(is_g, jnp.tanh(gates), jax.nn.sigmoid(gates))
                i = act[:, 0 * H:1 * H]
                f = act[:, 1 * H:2 * H]
                g = act[:, 2 * H:3 * H]
                o = act[:, 3 * H:4 * H]
                c = f * c + i * g
                h = o * jnp.tanh(c)
                if store_seq:
                    hseq_ref[t * B_pad:(t + 1) * B_pad, :] = h.astype(hseq_ref.dtype)
            return h

        # Layer 0: input projection fused in-kernel -- one (T*B_pad, D)@(D, 4H)
        # bf16 MXU matmul, f32 accumulation, bias folded once.
        gx0 = jnp.dot(x_ref[...], wih0_ref[...],
                      preferred_element_type=jnp.float32) + b0_ref[...]
        h_last = run_layer(gx0, whh0_ref[...], store_seq=num_layers > 1)

        # Layers >= 1: one (T*B_pad, H)@(H, 4H) matmul over the VMEM-resident
        # sequence, hoisted out of the recurrence; bias folded once.
        for l in range(num_layers - 1):
            wih_ref = extra[3 * l]
            whh_ref = extra[3 * l + 1]
            b_ref = extra[3 * l + 2]
            gx = jnp.dot(hseq_ref[...], wih_ref[...],
                         preferred_element_type=jnp.float32) + b_ref[...]
            h_last = run_layer(gx, whh_ref[...],
                               store_seq=(l + 1) < (num_layers - 1))

        # Fused FC on the last timestep only; full lane-dense (B_pad, C_pad) store.
        logits = jnp.dot(h_last.astype(wfc_ref.dtype), wfc_ref[...],
                         preferred_element_type=jnp.float32) + bfc_ref[...]
        out_ref[...] = logits.astype(out_ref.dtype)

    return kernel


def _fused_forward(x_tm, layers, w_fc_t, b_fc, *, T, B_pad, H, D, num_layers,
                   C_pad):
    inputs = [x_tm, layers[0]["w_ih_t"], layers[0]["b"], layers[0]["w_hh_t"]]
    in_specs = [
        pl.BlockSpec((T * B_pad, D), lambda: (0, 0)),
        pl.BlockSpec((D, 4 * H), lambda: (0, 0)),
        pl.BlockSpec((1, 4 * H), lambda: (0, 0)),
        pl.BlockSpec((H, 4 * H), lambda: (0, 0)),
    ]
    for l in range(1, num_layers):
        inputs += [layers[l]["w_ih_t"], layers[l]["w_hh_t"], layers[l]["b"]]
        in_specs += [
            pl.BlockSpec((H, 4 * H), lambda: (0, 0)),
            pl.BlockSpec((H, 4 * H), lambda: (0, 0)),
            pl.BlockSpec((1, 4 * H), lambda: (0, 0)),
        ]
    inputs += [w_fc_t, b_fc]
    in_specs += [
        pl.BlockSpec((H, C_pad), lambda: (0, 0)),
        pl.BlockSpec((1, C_pad), lambda: (0, 0)),
    ]

    kernel = _make_fused_kernel(T=T, B_pad=B_pad, H=H, num_layers=num_layers)

    return pl.pallas_call(
        kernel,
        out_shape=jax.ShapeDtypeStruct((B_pad, C_pad), jnp.float32),
        in_specs=in_specs,
        out_specs=pl.BlockSpec((B_pad, C_pad), lambda: (0, 0)),
        scratch_shapes=[pltpu.VMEM((T * B_pad, H), jnp.bfloat16)],
        compiler_params=pltpu.CompilerParams(vmem_limit_bytes=32 * 1024 * 1024),
    )(*inputs)


# ---------------------------------------------------------------------------
# Params + public forward
# ---------------------------------------------------------------------------
def init_lstm_model_params(key, input_size, hidden_size, num_layers, num_classes):
    """Deterministic init mimicking PyTorch's uniform(-1/sqrt(H), 1/sqrt(H)).

    Weights are stored pre-transposed and in bf16 (native MXU path); biases are
    fused (b_ih + b_hh) and kept in f32 so accumulation / recurrence stay f32.
    """
    params = {"layers": []}
    bound = 1.0 / jnp.sqrt(jnp.asarray(hidden_size, jnp.float32))
    for layer in range(num_layers):
        d_in = input_size if layer == 0 else hidden_size
        key, k1, k2, k3, k4 = jax.random.split(key, 5)
        w_ih = jax.random.uniform(k1, (4 * hidden_size, d_in), jnp.float32, -bound, bound)
        w_hh = jax.random.uniform(k2, (4 * hidden_size, hidden_size), jnp.float32, -bound, bound)
        b_ih = jax.random.uniform(k3, (4 * hidden_size,), jnp.float32, -bound, bound)
        b_hh = jax.random.uniform(k4, (4 * hidden_size,), jnp.float32, -bound, bound)
        params["layers"].append(
            {
                "w_ih_t": jnp.transpose(w_ih).astype(jnp.bfloat16),   # (d_in, 4H)
                "w_hh_t": jnp.transpose(w_hh).astype(jnp.bfloat16),   # (H, 4H)
                "b": (b_ih + b_hh).reshape(1, 4 * hidden_size),       # f32
            }
        )
    key, kf1, kf2 = jax.random.split(key, 3)
    w_fc = jax.random.uniform(kf1, (num_classes, hidden_size), jnp.float32, -bound, bound)
    b_fc = jax.random.uniform(kf2, (num_classes,), jnp.float32, -bound, bound)
    params["w_fc_t"] = jnp.transpose(w_fc).astype(jnp.bfloat16)       # (H, C)
    params["b_fc"] = b_fc.reshape(1, num_classes)                     # f32
    return params


@jax.jit
def lstm_model_forward(params, x):
    """x: (B, T, input_size) batch_first, like the PyTorch module (eval mode)."""
    x = x.astype(jnp.float32)
    B, T, D = x.shape
    layers = params["layers"]
    H = layers[0]["w_hh_t"].shape[0]
    num_layers = len(layers)
    B_pad = ((B + 7) // 8) * 8            # sublane-align the batch
    C = params["b_fc"].shape[-1]
    C_pad = ((C + 127) // 128) * 128      # lane-dense output block

    # Time-major, batch-padded view of x (tiny: D-wide, not 4H-wide); the 4H
    # expansion now happens inside the kernel and never touches HBM.
    x_tm = jnp.transpose(x, (1, 0, 2))                               # (T, B, D)
    if B_pad != B:
        x_tm = jnp.pad(x_tm, ((0, 0), (0, B_pad - B), (0, 0)))
    x_tm = x_tm.reshape(T * B_pad, D).astype(jnp.bfloat16)

    # Pad FC weight/bias to the lane-dense output width (tiny, fused by XLA).
    w_fc_t = params["w_fc_t"]
    b_fc = params["b_fc"]
    if C_pad != C:
        w_fc_t = jnp.pad(w_fc_t, ((0, 0), (0, C_pad - C)))
        b_fc = jnp.pad(b_fc, ((0, 0), (0, C_pad - C)))

    out_pad = _fused_forward(x_tm, layers, w_fc_t, b_fc,
                             T=T, B_pad=B_pad, H=H, D=D,
                             num_layers=num_layers, C_pad=C_pad)
    return out_pad[:B, :C]


# ---------------------------------------------------------------------------
# Main
# ---------------------------------------------------------------------------
if __name__ == "__main__":
    batch = 2
    seq_len = 8
    input_size = 16
    hidden_size = 32
    num_layers = 2
    num_classes = 4

    key = jax.random.PRNGKey(0)
    key, k_x, k_p = jax.random.split(key, 3)

    x = jax.random.normal(k_x, (batch, seq_len, input_size), dtype=jnp.float32)
    params = init_lstm_model_params(k_p, input_size, hidden_size, num_layers, num_classes)

    out = lstm_model_forward(params, x)
    out = jax.block_until_ready(out)

    assert out.shape == (batch, num_classes), out.shape
    assert out.dtype == jnp.float32, out.dtype
    print("KERNEL_OK")
</pallas_src>

<mosaic_0001>
module attributes {stable_mosaic.version = 11 : i64} {
  func.func @kernel(%arg0: memref<64x16xbf16, #tpu.memory_space<vmem>>, %arg1: memref<16x128xbf16, #tpu.memory_space<vmem>>, %arg2: memref<1x128xf32, #tpu.memory_space<vmem>>, %arg3: memref<32x128xbf16, #tpu.memory_space<vmem>>, %arg4: memref<32x128xbf16, #tpu.memory_space<vmem>>, %arg5: memref<32x128xbf16, #tpu.memory_space<vmem>>, %arg6: memref<1x128xf32, #tpu.memory_space<vmem>>, %arg7: memref<32x128xbf16, #tpu.memory_space<vmem>>, %arg8: memref<1x128xf32, #tpu.memory_space<vmem>>, %arg9: memref<8x128xf32, #tpu.memory_space<vmem>>, %arg10: memref<64x32xbf16, #tpu.memory_space<vmem>>) attributes {dimension_semantics = [], scalar_prefetch = 0 : i64, scratch_operands = 1 : i64, tpu.core_type = #tpu.core_type<tc>} {
    %0 = tpu.iota {dimensions = array<i32: 1>} : vector<8x128xi32>
    %c64_i32 = arith.constant 64 : i32
    %1 = vector.broadcast %c64_i32 : i32 to vector<8x128xi32>
    %2 = arith.cmpi sge, %0, %1 : vector<8x128xi32>
    %c96_i32 = arith.constant 96 : i32
    %3 = vector.broadcast %c96_i32 : i32 to vector<8x128xi32>
    %4 = arith.cmpi slt, %0, %3 : vector<8x128xi32>
    %5 = arith.andi %2, %4 : vector<8x128xi1>
    %c0 = arith.constant 0 : index
    %c0_0 = arith.constant 0 : index
    %6 = vector.load %arg0[%c0, %c0_0] : memref<64x16xbf16, #tpu.memory_space<vmem>>, vector<64x16xbf16>
    %c0_1 = arith.constant 0 : index
    %c0_2 = arith.constant 0 : index
    %7 = vector.load %arg1[%c0_1, %c0_2] : memref<16x128xbf16, #tpu.memory_space<vmem>>, vector<16x128xbf16>
    %cst = arith.constant dense<0.000000e+00> : vector<64x128xf32>
    %8 = tpu.matmul %6, %7, %cst {dimension_numbers = #tpu.dot_dimension_numbers<[1], [0], [0], [1], [0, 0, 1, 1], [], []>} : vector<64x16xbf16>, vector<16x128xbf16>, vector<64x128xf32> -> vector<64x128xf32>
    %c0_3 = arith.constant 0 : index
    %c0_4 = arith.constant 0 : index
    %9 = vector.load %arg2[%c0_3, %c0_4] : memref<1x128xf32, #tpu.memory_space<vmem>>, vector<1x128xf32>
    %10 = vector.broadcast %9 : vector<1x128xf32> to vector<64x128xf32>
    %11 = arith.addf %8, %10 : vector<64x128xf32>
    %c0_5 = arith.constant 0 : index
    %c0_6 = arith.constant 0 : index
    %12 = vector.load %arg3[%c0_5, %c0_6] : memref<32x128xbf16, #tpu.memory_space<vmem>>, vector<32x128xbf16>
    %cst_7 = arith.constant 0.000000e+00 : f32
    %13 = vector.broadcast %cst_7 : f32 to vector<8x32xf32>
    %cst_8 = arith.constant 0.000000e+00 : f32
    %14 = vector.broadcast %cst_8 : f32 to vector<8x32xf32>
    %15 = vector.extract_strided_slice %11 {offsets = [0, 0], sizes = [8, 128], strides = [1, 1]} : vector<64x128xf32> to vector<8x128xf32>
    %16 = arith.truncf %13 : vector<8x32xf32> to vector<8x32xbf16>
    %cst_9 = arith.constant dense<0.000000e+00> : vector<8x128xf32>
    %17 = tpu.matmul %16, %12, %cst_9 {dimension_numbers = #tpu.dot_dimension_numbers<[1], [0], [0], [1], [0, 0, 1, 1], [], []>} : vector<8x32xbf16>, vector<32x128xbf16>, vector<8x128xf32> -> vector<8x128xf32>
    %18 = arith.addf %15, %17 : vector<8x128xf32>
    %19 = math.tanh %18 : vector<8x128xf32>
    %20 = arith.negf %18 : vector<8x128xf32>
    %21 = math.exp %20 : vector<8x128xf32>
    %cst_10 = arith.constant 1.000000e+00 : f32
    %22 = vector.broadcast %cst_10 : f32 to vector<8x128xf32>
    %23 = arith.addf %22, %21 : vector<8x128xf32>
    %24 = arith.divf %22, %23 : vector<8x128xf32>
    %25 = arith.select %5, %19, %24 : vector<8x128xi1>, vector<8x128xf32>
    %26 = vector.extract_strided_slice %25 {offsets = [0, 0], sizes = [8, 32], strides = [1, 1]} : vector<8x128xf32> to vector<8x32xf32>
    %27 = vector.extract_strided_slice %25 {offsets = [0, 32], sizes = [8, 32], strides = [1, 1]} : vector<8x128xf32> to vector<8x32xf32>
    %28 = vector.extract_strided_slice %25 {offsets = [0, 64], sizes = [8, 32], strides = [1, 1]} : vector<8x128xf32> to vector<8x32xf32>
    %29 = vector.extract_strided_slice %25 {offsets = [0, 96], sizes = [8, 32], strides = [1, 1]} : vector<8x128xf32> to vector<8x32xf32>
    %30 = arith.mulf %27, %14 : vector<8x32xf32>
    %31 = arith.mulf %26, %28 : vector<8x32xf32>
    %32 = arith.addf %30, %31 : vector<8x32xf32>
    %33 = math.tanh %32 : vector<8x32xf32>
    %34 = arith.mulf %29, %33 : vector<8x32xf32>
    %35 = arith.truncf %34 : vector<8x32xf32> to vector<8x32xbf16>
    %c0_11 = arith.constant 0 : index
    %c0_12 = arith.constant 0 : index
    %36 = vector.load %arg10[%c0_11, %c0_12] : memref<64x32xbf16, #tpu.memory_space<vmem>>, vector<8x32xbf16>
    tpu.vector_store %arg10[%c0_11, %c0_12], %35 {strides = array<i32>} : memref<64x32xbf16, #tpu.memory_space<vmem>>, vector<8x32xbf16>,
    %37 = vector.extract_strided_slice %11 {offsets = [8, 0], sizes = [8, 128], strides = [1, 1]} : vector<64x128xf32> to vector<8x128xf32>
    %38 = arith.truncf %34 : vector<8x32xf32> to vector<8x32xbf16>
    %cst_13 = arith.constant dense<0.000000e+00> : vector<8x128xf32>
    %39 = tpu.matmul %38, %12, %cst_13 {dimension_numbers = #tpu.dot_dimension_numbers<[1], [0], [0], [1], [0, 0, 1, 1], [], []>} : vector<8x32xbf16>, vector<32x128xbf16>, vector<8x128xf32> -> vector<8x128xf32>
    %40 = arith.addf %37, %39 : vector<8x128xf32>
    %41 = math.tanh %40 : vector<8x128xf32>
    %42 = arith.negf %40 : vector<8x128xf32>
    %43 = math.exp %42 : vector<8x128xf32>
    %cst_14 = arith.constant 1.000000e+00 : f32
    %44 = vector.broadcast %cst_14 : f32 to vector<8x128xf32>
    %45 = arith.addf %44, %43 : vector<8x128xf32>
    %46 = arith.divf %44, %45 : vector<8x128xf32>
    %47 = arith.select %5, %41, %46 : vector<8x128xi1>, vector<8x128xf32>
    %48 = vector.extract_strided_slice %47 {offsets = [0, 0], sizes = [8, 32], strides = [1, 1]} : vector<8x128xf32> to vector<8x32xf32>
    %49 = vector.extract_strided_slice %47 {offsets = [0, 32], sizes = [8, 32], strides = [1, 1]} : vector<8x128xf32> to vector<8x32xf32>
    %50 = vector.extract_strided_slice %47 {offsets = [0, 64], sizes = [8, 32], strides = [1, 1]} : vector<8x128xf32> to vector<8x32xf32>
    %51 = vector.extract_strided_slice %47 {offsets = [0, 96], sizes = [8, 32], strides = [1, 1]} : vector<8x128xf32> to vector<8x32xf32>
    %52 = arith.mulf %49, %32 : vector<8x32xf32>
    %53 = arith.mulf %48, %50 : vector<8x32xf32>
    %54 = arith.addf %52, %53 : vector<8x32xf32>
    %55 = math.tanh %54 : vector<8x32xf32>
    %56 = arith.mulf %51, %55 : vector<8x32xf32>
    %57 = arith.truncf %56 : vector<8x32xf32> to vector<8x32xbf16>
    %c8 = arith.constant 8 : index
    %c0_15 = arith.constant 0 : index
    %58 = vector.load %arg10[%c8, %c0_15] : memref<64x32xbf16, #tpu.memory_space<vmem>>, vector<8x32xbf16>
    tpu.vector_store %arg10[%c8, %c0_15], %57 {strides = array<i32>} : memref<64x32xbf16, #tpu.memory_space<vmem>>, vector<8x32xbf16>,
    %59 = vector.extract_strided_slice %11 {offsets = [16, 0], sizes = [8, 128], strides = [1, 1]} : vector<64x128xf32> to vector<8x128xf32>
    %60 = arith.truncf %56 : vector<8x32xf32> to vector<8x32xbf16>
    %cst_16 = arith.constant dense<0.000000e+00> : vector<8x128xf32>
    %61 = tpu.matmul %60, %12, %cst_16 {dimension_numbers = #tpu.dot_dimension_numbers<[1], [0], [0], [1], [0, 0, 1, 1], [], []>} : vector<8x32xbf16>, vector<32x128xbf16>, vector<8x128xf32> -> vector<8x128xf32>
    %62 = arith.addf %59, %61 : vector<8x128xf32>
    %63 = math.tanh %62 : vector<8x128xf32>
    %64 = arith.negf %62 : vector<8x128xf32>
    %65 = math.exp %64 : vector<8x128xf32>
    %cst_17 = arith.constant 1.000000e+00 : f32
    %66 = vector.broadcast %cst_17 : f32 to vector<8x128xf32>
    %67 = arith.addf %66, %65 : vector<8x128xf32>
    %68 = arith.divf %66, %67 : vector<8x128xf32>
    %69 = arith.select %5, %63, %68 : vector<8x128xi1>, vector<8x128xf32>
    %70 = vector.extract_strided_slice %69 {offsets = [0, 0], sizes = [8, 32], strides = [1, 1]} : vector<8x128xf32> to vector<8x32xf32>
    %71 = vector.extract_strided_slice %69 {offsets = [0, 32], sizes = [8, 32], strides = [1, 1]} : vector<8x128xf32> to vector<8x32xf32>
    %72 = vector.extract_strided_slice %69 {offsets = [0, 64], sizes = [8, 32], strides = [1, 1]} : vector<8x128xf32> to vector<8x32xf32>
    %73 = vector.extract_strided_slice %69 {offsets = [0, 96], sizes = [8, 32], strides = [1, 1]} : vector<8x128xf32> to vector<8x32xf32>
    %74 = arith.mulf %71, %54 : vector<8x32xf32>
    %75 = arith.mulf %70, %72 : vector<8x32xf32>
    %76 = arith.addf %74, %75 : vector<8x32xf32>
    %77 = math.tanh %76 : vector<8x32xf32>
    %78 = arith.mulf %73, %77 : vector<8x32xf32>
    %79 = arith.truncf %78 : vector<8x32xf32> to vector<8x32xbf16>
    %c16 = arith.constant 16 : index
    %c0_18 = arith.constant 0 : index
    %80 = vector.load %arg10[%c16, %c0_18] : memref<64x32xbf16, #tpu.memory_space<vmem>>, vector<8x32xbf16>
    tpu.vector_store %arg10[%c16, %c0_18], %79 {strides = array<i32>} : memref<64x32xbf16, #tpu.memory_space<vmem>>, vector<8x32xbf16>,
    %81 = vector.extract_strided_slice %11 {offsets = [24, 0], sizes = [8, 128], strides = [1, 1]} : vector<64x128xf32> to vector<8x128xf32>
    %82 = arith.truncf %78 : vector<8x32xf32> to vector<8x32xbf16>
    %cst_19 = arith.constant dense<0.000000e+00> : vector<8x128xf32>
    %83 = tpu.matmul %82, %12, %cst_19 {dimension_numbers = #tpu.dot_dimension_numbers<[1], [0], [0], [1], [0, 0, 1, 1], [], []>} : vector<8x32xbf16>, vector<32x128xbf16>, vector<8x128xf32> -> vector<8x128xf32>
    %84 = arith.addf %81, %83 : vector<8x128xf32>
    %85 = math.tanh %84 : vector<8x128xf32>
    %86 = arith.negf %84 : vector<8x128xf32>
    %87 = math.exp %86 : vector<8x128xf32>
    %cst_20 = arith.constant 1.000000e+00 : f32
    %88 = vector.broadcast %cst_20 : f32 to vector<8x128xf32>
    %89 = arith.addf %88, %87 : vector<8x128xf32>
    %90 = arith.divf %88, %89 : vector<8x128xf32>
    %91 = arith.select %5, %85, %90 : vector<8x128xi1>, vector<8x128xf32>
    %92 = vector.extract_strided_slice %91 {offsets = [0, 0], sizes = [8, 32], strides = [1, 1]} : vector<8x128xf32> to vector<8x32xf32>
    %93 = vector.extract_strided_slice %91 {offsets = [0, 32], sizes = [8, 32], strides = [1, 1]} : vector<8x128xf32> to vector<8x32xf32>
    %94 = vector.extract_strided_slice %91 {offsets = [0, 64], sizes = [8, 32], strides = [1, 1]} : vector<8x128xf32> to vector<8x32xf32>
    %95 = vector.extract_strided_slice %91 {offsets = [0, 96], sizes = [8, 32], strides = [1, 1]} : vector<8x128xf32> to vector<8x32xf32>
    %96 = arith.mulf %93, %76 : vector<8x32xf32>
    %97 = arith.mulf %92, %94 : vector<8x32xf32>
    %98 = arith.addf %96, %97 : vector<8x32xf32>
    %99 = math.tanh %98 : vector<8x32xf32>
    %100 = arith.mulf %95, %99 : vector<8x32xf32>
    %101 = arith.truncf %100 : vector<8x32xf32> to vector<8x32xbf16>
    %c24 = arith.constant 24 : index
    %c0_21 = arith.constant 0 : index
    %102 = vector.load %arg10[%c24, %c0_21] : memref<64x32xbf16, #tpu.memory_space<vmem>>, vector<8x32xbf16>
    tpu.vector_store %arg10[%c24, %c0_21], %101 {strides = array<i32>} : memref<64x32xbf16, #tpu.memory_space<vmem>>, vector<8x32xbf16>,
    %103 = vector.extract_strided_slice %11 {offsets = [32, 0], sizes = [8, 128], strides = [1, 1]} : vector<64x128xf32> to vector<8x128xf32>
    %104 = arith.truncf %100 : vector<8x32xf32> to vector<8x32xbf16>
    %cst_22 = arith.constant dense<0.000000e+00> : vector<8x128xf32>
    %105 = tpu.matmul %104, %12, %cst_22 {dimension_numbers = #tpu.dot_dimension_numbers<[1], [0], [0], [1], [0, 0, 1, 1], [], []>} : vector<8x32xbf16>, vector<32x128xbf16>, vector<8x128xf32> -> vector<8x128xf32>
    %106 = arith.addf %103, %105 : vector<8x128xf32>
    %107 = math.tanh %106 : vector<8x128xf32>
    %108 = arith.negf %106 : vector<8x128xf32>
    %109 = math.exp %108 : vector<8x128xf32>
    %cst_23 = arith.constant 1.000000e+00 : f32
    %110 = vector.broadcast %cst_23 : f32 to vector<8x128xf32>
    %111 = arith.addf %110, %109 : vector<8x128xf32>
    %112 = arith.divf %110, %111 : vector<8x128xf32>
    %113 = arith.select %5, %107, %112 : vector<8x128xi1>, vector<8x128xf32>
    %114 = vector.extract_strided_slice %113 {offsets = [0, 0], sizes = [8, 32], strides = [1, 1]} : vector<8x128xf32> to vector<8x32xf32>
    %115 = vector.extract_strided_slice %113 {offsets = [0, 32], sizes = [8, 32], strides = [1, 1]} : vector<8x128xf32> to vector<8x32xf32>
    %116 = vector.extract_strided_slice %113 {offsets = [0, 64], sizes = [8, 32], strides = [1, 1]} : vector<8x128xf32> to vector<8x32xf32>
    %117 = vector.extract_strided_slice %113 {offsets = [0, 96], sizes = [8, 32], strides = [1, 1]} : vector<8x128xf32> to vector<8x32xf32>
    %118 = arith.mulf %115, %98 : vector<8x32xf32>
    %119 = arith.mulf %114, %116 : vector<8x32xf32>
    %120 = arith.addf %118, %119 : vector<8x32xf32>
    %121 = math.tanh %120 : vector<8x32xf32>
    %122 = arith.mulf %117, %121 : vector<8x32xf32>
    %123 = arith.truncf %122 : vector<8x32xf32> to vector<8x32xbf16>
    %c32 = arith.constant 32 : index
    %c0_24 = arith.constant 0 : index
    %124 = vector.load %arg10[%c32, %c0_24] : memref<64x32xbf16, #tpu.memory_space<vmem>>, vector<8x32xbf16>
    tpu.vector_store %arg10[%c32, %c0_24], %123 {strides = array<i32>} : memref<64x32xbf16, #tpu.memory_space<vmem>>, vector<8x32xbf16>,
    %125 = vector.extract_strided_slice %11 {offsets = [40, 0], sizes = [8, 128], strides = [1, 1]} : vector<64x128xf32> to vector<8x128xf32>
    %126 = arith.truncf %122 : vector<8x32xf32> to vector<8x32xbf16>
    %cst_25 = arith.constant dense<0.000000e+00> : vector<8x128xf32>
    %127 = tpu.matmul %126, %12, %cst_25 {dimension_numbers = #tpu.dot_dimension_numbers<[1], [0], [0], [1], [0, 0, 1, 1], [], []>} : vector<8x32xbf16>, vector<32x128xbf16>, vector<8x128xf32> -> vector<8x128xf32>
    %128 = arith.addf %125, %127 : vector<8x128xf32>
    %129 = math.tanh %128 : vector<8x128xf32>
    %130 = arith.negf %128 : vector<8x128xf32>
    %131 = math.exp %130 : vector<8x128xf32>
    %cst_26 = arith.constant 1.000000e+00 : f32
    %132 = vector.broadcast %cst_26 : f32 to vector<8x128xf32>
    %133 = arith.addf %132, %131 : vector<8x128xf32>
    %134 = arith.divf %132, %133 : vector<8x128xf32>
    %135 = arith.select %5, %129, %134 : vector<8x128xi1>, vector<8x128xf32>
    %136 = vector.extract_strided_slice %135 {offsets = [0, 0], sizes = [8, 32], strides = [1, 1]} : vector<8x128xf32> to vector<8x32xf32>
    %137 = vector.extract_strided_slice %135 {offsets = [0, 32], sizes = [8, 32], strides = [1, 1]} : vector<8x128xf32> to vector<8x32xf32>
    %138 = vector.extract_strided_slice %135 {offsets = [0, 64], sizes = [8, 32], strides = [1, 1]} : vector<8x128xf32> to vector<8x32xf32>
    %139 = vector.extract_strided_slice %135 {offsets = [0, 96], sizes = [8, 32], strides = [1, 1]} : vector<8x128xf32> to vector<8x32xf32>
    %140 = arith.mulf %137, %120 : vector<8x32xf32>
    %141 = arith.mulf %136, %138 : vector<8x32xf32>
    %142 = arith.addf %140, %141 : vector<8x32xf32>
    %143 = math.tanh %142 : vector<8x32xf32>
    %144 = arith.mulf %139, %143 : vector<8x32xf32>
    %145 = arith.truncf %144 : vector<8x32xf32> to vector<8x32xbf16>
    %c40 = arith.constant 40 : index
    %c0_27 = arith.constant 0 : index
    %146 = vector.load %arg10[%c40, %c0_27] : memref<64x32xbf16, #tpu.memory_space<vmem>>, vector<8x32xbf16>
    tpu.vector_store %arg10[%c40, %c0_27], %145 {strides = array<i32>} : memref<64x32xbf16, #tpu.memory_space<vmem>>, vector<8x32xbf16>,
    %147 = vector.extract_strided_slice %11 {offsets = [48, 0], sizes = [8, 128], strides = [1, 1]} : vector<64x128xf32> to vector<8x128xf32>
    %148 = arith.truncf %144 : vector<8x32xf32> to vector<8x32xbf16>
    %cst_28 = arith.constant dense<0.000000e+00> : vector<8x128xf32>
    %149 = tpu.matmul %148, %12, %cst_28 {dimension_numbers = #tpu.dot_dimension_numbers<[1], [0], [0], [1], [0, 0, 1, 1], [], []>} : vector<8x32xbf16>, vector<32x128xbf16>, vector<8x128xf32> -> vector<8x128xf32>
    %150 = arith.addf %147, %149 : vector<8x128xf32>
    %151 = math.tanh %150 : vector<8x128xf32>
    %152 = arith.negf %150 : vector<8x128xf32>
    %153 = math.exp %152 : vector<8x128xf32>
    %cst_29 = arith.constant 1.000000e+00 : f32
    %154 = vector.broadcast %cst_29 : f32 to vector<8x128xf32>
    %155 = arith.addf %154, %153 : vector<8x128xf32>
    %156 = arith.divf %154, %155 : vector<8x128xf32>
    %157 = arith.select %5, %151, %156 : vector<8x128xi1>, vector<8x128xf32>
    %158 = vector.extract_strided_slice %157 {offsets = [0, 0], sizes = [8, 32], strides = [1, 1]} : vector<8x128xf32> to vector<8x32xf32>
    %159 = vector.extract_strided_slice %157 {offsets = [0, 32], sizes = [8, 32], strides = [1, 1]} : vector<8x128xf32> to vector<8x32xf32>
    %160 = vector.extract_strided_slice %157 {offsets = [0, 64], sizes = [8, 32], strides = [1, 1]} : vector<8x128xf32> to vector<8x32xf32>
    %161 = vector.extract_strided_slice %157 {offsets = [0, 96], sizes = [8, 32], strides = [1, 1]} : vector<8x128xf32> to vector<8x32xf32>
    %162 = arith.mulf %159, %142 : vector<8x32xf32>
    %163 = arith.mulf %158, %160 : vector<8x32xf32>
    %164 = arith.addf %162, %163 : vector<8x32xf32>
    %165 = math.tanh %164 : vector<8x32xf32>
    %166 = arith.mulf %161, %165 : vector<8x32xf32>
    %167 = arith.truncf %166 : vector<8x32xf32> to vector<8x32xbf16>
    %c48 = arith.constant 48 : index
    %c0_30 = arith.constant 0 : index
    %168 = vector.load %arg10[%c48, %c0_30] : memref<64x32xbf16, #tpu.memory_space<vmem>>, vector<8x32xbf16>
    tpu.vector_store %arg10[%c48, %c0_30], %167 {strides = array<i32>} : memref<64x32xbf16, #tpu.memory_space<vmem>>, vector<8x32xbf16>,
    %169 = vector.extract_strided_slice %11 {offsets = [56, 0], sizes = [8, 128], strides = [1, 1]} : vector<64x128xf32> to vector<8x128xf32>
    %170 = arith.truncf %166 : vector<8x32xf32> to vector<8x32xbf16>
    %cst_31 = arith.constant dense<0.000000e+00> : vector<8x128xf32>
    %171 = tpu.matmul %170, %12, %cst_31 {dimension_numbers = #tpu.dot_dimension_numbers<[1], [0], [0], [1], [0, 0, 1, 1], [], []>} : vector<8x32xbf16>, vector<32x128xbf16>, vector<8x128xf32> -> vector<8x128xf32>
    %172 = arith.addf %169, %171 : vector<8x128xf32>
    %173 = math.tanh %172 : vector<8x128xf32>
    %174 = arith.negf %172 : vector<8x128xf32>
    %175 = math.exp %174 : vector<8x128xf32>
    %cst_32 = arith.constant 1.000000e+00 : f32
    %176 = vector.broadcast %cst_32 : f32 to vector<8x128xf32>
    %177 = arith.addf %176, %175 : vector<8x128xf32>
    %178 = arith.divf %176, %177 : vector<8x128xf32>
    %179 = arith.select %5, %173, %178 : vector<8x128xi1>, vector<8x128xf32>
    %180 = vector.extract_strided_slice %179 {offsets = [0, 0], sizes = [8, 32], strides = [1, 1]} : vector<8x128xf32> to vector<8x32xf32>
    %181 = vector.extract_strided_slice %179 {offsets = [0, 32], sizes = [8, 32], strides = [1, 1]} : vector<8x128xf32> to vector<8x32xf32>
    %182 = vector.extract_strided_slice %179 {offsets = [0, 64], sizes = [8, 32], strides = [1, 1]} : vector<8x128xf32> to vector<8x32xf32>
    %183 = vector.extract_strided_slice %179 {offsets = [0, 96], sizes = [8, 32], strides = [1, 1]} : vector<8x128xf32> to vector<8x32xf32>
    %184 = arith.mulf %181, %164 : vector<8x32xf32>
    %185 = arith.mulf %180, %182 : vector<8x32xf32>
    %186 = arith.addf %184, %185 : vector<8x32xf32>
    %187 = math.tanh %186 : vector<8x32xf32>
    %188 = arith.mulf %183, %187 : vector<8x32xf32>
    %189 = arith.truncf %188 : vector<8x32xf32> to vector<8x32xbf16>
    %c56 = arith.constant 56 : index
    %c0_33 = arith.constant 0 : index
    %190 = vector.load %arg10[%c56, %c0_33] : memref<64x32xbf16, #tpu.memory_space<vmem>>, vector<8x32xbf16>
    tpu.vector_store %arg10[%c56, %c0_33], %189 {strides = array<i32>} : memref<64x32xbf16, #tpu.memory_space<vmem>>, vector<8x32xbf16>,
    %c0_34 = arith.constant 0 : index
    %c0_35 = arith.constant 0 : index
    %191 = vector.load %arg10[%c0_34, %c0_35] : memref<64x32xbf16, #tpu.memory_space<vmem>>, vector<64x32xbf16>
    %c0_36 = arith.constant 0 : index
    %c0_37 = arith.constant 0 : index
    %192 = vector.load %arg4[%c0_36, %c0_37] : memref<32x128xbf16, #tpu.memory_space<vmem>>, vector<32x128xbf16>
    %cst_38 = arith.constant dense<0.000000e+00> : vector<64x128xf32>
    %193 = tpu.matmul %191, %192, %cst_38 {dimension_numbers = #tpu.dot_dimension_numbers<[1], [0], [0], [1], [0, 0, 1, 1], [], []>} : vector<64x32xbf16>, vector<32x128xbf16>, vector<64x128xf32> -> vector<64x128xf32>
    %c0_39 = arith.constant 0 : index
    %c0_40 = arith.constant 0 : index
    %194 = vector.load %arg6[%c0_39, %c0_40] : memref<1x128xf32, #tpu.memory_space<vmem>>, vector<1x128xf32>
    %195 = vector.broadcast %194 : vector<1x128xf32> to vector<64x128xf32>
    %196 = arith.addf %193, %195 : vector<64x128xf32>
    %c0_41 = arith.constant 0 : index
    %c0_42 = arith.constant 0 : index
    %197 = vector.load %arg5[%c0_41, %c0_42] : memref<32x128xbf16, #tpu.memory_space<vmem>>, vector<32x128xbf16>
    %cst_43 = arith.constant 0.000000e+00 : f32
    %198 = vector.broadcast %cst_43 : f32 to vector<8x32xf32>
    %cst_44 = arith.constant 0.000000e+00 : f32
    %199 = vector.broadcast %cst_44 : f32 to vector<8x32xf32>
    %200 = vector.extract_strided_slice %196 {offsets = [0, 0], sizes = [8, 128], strides = [1, 1]} : vector<64x128xf32> to vector<8x128xf32>
    %201 = arith.truncf %198 : vector<8x32xf32> to vector<8x32xbf16>
    %cst_45 = arith.constant dense<0.000000e+00> : vector<8x128xf32>
    %202 = tpu.matmul %201, %197, %cst_45 {dimension_numbers = #tpu.dot_dimension_numbers<[1], [0], [0], [1], [0, 0, 1, 1], [], []>} : vector<8x32xbf16>, vector<32x128xbf16>, vector<8x128xf32> -> vector<8x128xf32>
    %203 = arith.addf %200, %202 : vector<8x128xf32>
    %204 = math.tanh %203 : vector<8x128xf32>
    %205 = arith.negf %203 : vector<8x128xf32>
    %206 = math.exp %205 : vector<8x128xf32>
    %cst_46 = arith.constant 1.000000e+00 : f32
    %207 = vector.broadcast %cst_46 : f32 to vector<8x128xf32>
    %208 = arith.addf %207, %206 : vector<8x128xf32>
    %209 = arith.divf %207, %208 : vector<8x128xf32>
    %210 = arith.select %5, %204, %209 : vector<8x128xi1>, vector<8x128xf32>
    %211 = vector.extract_strided_slice %210 {offsets = [0, 0], sizes = [8, 32], strides = [1, 1]} : vector<8x128xf32> to vector<8x32xf32>
    %212 = vector.extract_strided_slice %210 {offsets = [0, 32], sizes = [8, 32], strides = [1, 1]} : vector<8x128xf32> to vector<8x32xf32>
    %213 = vector.extract_strided_slice %210 {offsets = [0, 64], sizes = [8, 32], strides = [1, 1]} : vector<8x128xf32> to vector<8x32xf32>
    %214 = vector.extract_strided_slice %210 {offsets = [0, 96], sizes = [8, 32], strides = [1, 1]} : vector<8x128xf32> to vector<8x32xf32>
    %215 = arith.mulf %212, %199 : vector<8x32xf32>
    %216 = arith.mulf %211, %213 : vector<8x32xf32>
    %217 = arith.addf %215, %216 : vector<8x32xf32>
    %218 = math.tanh %217 : vector<8x32xf32>
    %219 = arith.mulf %214, %218 : vector<8x32xf32>
    %220 = vector.extract_strided_slice %196 {offsets = [8, 0], sizes = [8, 128], strides = [1, 1]} : vector<64x128xf32> to vector<8x128xf32>
    %221 = arith.truncf %219 : vector<8x32xf32> to vector<8x32xbf16>
    %cst_47 = arith.constant dense<0.000000e+00> : vector<8x128xf32>
    %222 = tpu.matmul %221, %197, %cst_47 {dimension_numbers = #tpu.dot_dimension_numbers<[1], [0], [0], [1], [0, 0, 1, 1], [], []>} : vector<8x32xbf16>, vector<32x128xbf16>, vector<8x128xf32> -> vector<8x128xf32>
    %223 = arith.addf %220, %222 : vector<8x128xf32>
    %224 = math.tanh %223 : vector<8x128xf32>
    %225 = arith.negf %223 : vector<8x128xf32>
    %226 = math.exp %225 : vector<8x128xf32>
    %cst_48 = arith.constant 1.000000e+00 : f32
    %227 = vector.broadcast %cst_48 : f32 to vector<8x128xf32>
    %228 = arith.addf %227, %226 : vector<8x128xf32>
    %229 = arith.divf %227, %228 : vector<8x128xf32>
    %230 = arith.select %5, %224, %229 : vector<8x128xi1>, vector<8x128xf32>
    %231 = vector.extract_strided_slice %230 {offsets = [0, 0], sizes = [8, 32], strides = [1, 1]} : vector<8x128xf32> to vector<8x32xf32>
    %232 = vector.extract_strided_slice %230 {offsets = [0, 32], sizes = [8, 32], strides = [1, 1]} : vector<8x128xf32> to vector<8x32xf32>
    %233 = vector.extract_strided_slice %230 {offsets = [0, 64], sizes = [8, 32], strides = [1, 1]} : vector<8x128xf32> to vector<8x32xf32>
    %234 = vector.extract_strided_slice %230 {offsets = [0, 96], sizes = [8, 32], strides = [1, 1]} : vector<8x128xf32> to vector<8x32xf32>
    %235 = arith.mulf %232, %217 : vector<8x32xf32>
    %236 = arith.mulf %231, %233 : vector<8x32xf32>
    %237 = arith.addf %235, %236 : vector<8x32xf32>
    %238 = math.tanh %237 : vector<8x32xf32>
    %239 = arith.mulf %234, %238 : vector<8x32xf32>
    %240 = vector.extract_strided_slice %196 {offsets = [16, 0], sizes = [8, 128], strides = [1, 1]} : vector<64x128xf32> to vector<8x128xf32>
    %241 = arith.truncf %239 : vector<8x32xf32> to vector<8x32xbf16>
    %cst_49 = arith.constant dense<0.000000e+00> : vector<8x128xf32>
    %242 = tpu.matmul %241, %197, %cst_49 {dimension_numbers = #tpu.dot_dimension_numbers<[1], [0], [0], [1], [0, 0, 1, 1], [], []>} : vector<8x32xbf16>, vector<32x128xbf16>, vector<8x128xf32> -> vector<8x128xf32>
    %243 = arith.addf %240, %242 : vector<8x128xf32>
    %244 = math.tanh %243 : vector<8x128xf32>
    %245 = arith.negf %243 : vector<8x128xf32>
    %246 = math.exp %245 : vector<8x128xf32>
    %cst_50 = arith.constant 1.000000e+00 : f32
    %247 = vector.broadcast %cst_50 : f32 to vector<8x128xf32>
    %248 = arith.addf %247, %246 : vector<8x128xf32>
    %249 = arith.divf %247, %248 : vector<8x128xf32>
    %250 = arith.select %5, %244, %249 : vector<8x128xi1>, vector<8x128xf32>
    %251 = vector.extract_strided_slice %250 {offsets = [0, 0], sizes = [8, 32], strides = [1, 1]} : vector<8x128xf32> to vector<8x32xf32>
    %252 = vector.extract_strided_slice %250 {offsets = [0, 32], sizes = [8, 32], strides = [1, 1]} : vector<8x128xf32> to vector<8x32xf32>
    %253 = vector.extract_strided_slice %250 {offsets = [0, 64], sizes = [8, 32], strides = [1, 1]} : vector<8x128xf32> to vector<8x32xf32>
    %254 = vector.extract_strided_slice %250 {offsets = [0, 96], sizes = [8, 32], strides = [1, 1]} : vector<8x128xf32> to vector<8x32xf32>
    %255 = arith.mulf %252, %237 : vector<8x32xf32>
    %256 = arith.mulf %251, %253 : vector<8x32xf32>
    %257 = arith.addf %255, %256 : vector<8x32xf32>
    %258 = math.tanh %257 : vector<8x32xf32>
    %259 = arith.mulf %254, %258 : vector<8x32xf32>
    %260 = vector.extract_strided_slice %196 {offsets = [24, 0], sizes = [8, 128], strides = [1, 1]} : vector<64x128xf32> to vector<8x128xf32>
    %261 = arith.truncf %259 : vector<8x32xf32> to vector<8x32xbf16>
    %cst_51 = arith.constant dense<0.000000e+00> : vector<8x128xf32>
    %262 = tpu.matmul %261, %197, %cst_51 {dimension_numbers = #tpu.dot_dimension_numbers<[1], [0], [0], [1], [0, 0, 1, 1], [], []>} : vector<8x32xbf16>, vector<32x128xbf16>, vector<8x128xf32> -> vector<8x128xf32>
    %263 = arith.addf %260, %262 : vector<8x128xf32>
    %264 = math.tanh %263 : vector<8x128xf32>
    %265 = arith.negf %263 : vector<8x128xf32>
    %266 = math.exp %265 : vector<8x128xf32>
    %cst_52 = arith.constant 1.000000e+00 : f32
    %267 = vector.broadcast %cst_52 : f32 to vector<8x128xf32>
    %268 = arith.addf %267, %266 : vector<8x128xf32>
    %269 = arith.divf %267, %268 : vector<8x128xf32>
    %270 = arith.select %5, %264, %269 : vector<8x128xi1>, vector<8x128xf32>
    %271 = vector.extract_strided_slice %270 {offsets = [0, 0], sizes = [8, 32], strides = [1, 1]} : vector<8x128xf32> to vector<8x32xf32>
    %272 = vector.extract_strided_slice %270 {offsets = [0, 32], sizes = [8, 32], strides = [1, 1]} : vector<8x128xf32> to vector<8x32xf32>
    %273 = vector.extract_strided_slice %270 {offsets = [0, 64], sizes = [8, 32], strides = [1, 1]} : vector<8x128xf32> to vector<8x32xf32>
    %274 = vector.extract_strided_slice %270 {offsets = [0, 96], sizes = [8, 32], strides = [1, 1]} : vector<8x128xf32> to vector<8x32xf32>
    %275 = arith.mulf %272, %257 : vector<8x32xf32>
    %276 = arith.mulf %271, %273 : vector<8x32xf32>
    %277 = arith.addf %275, %276 : vector<8x32xf32>
    %278 = math.tanh %277 : vector<8x32xf32>
    %279 = arith.mulf %274, %278 : vector<8x32xf32>
    %280 = vector.extract_strided_slice %196 {offsets = [32, 0], sizes = [8, 128], strides = [1, 1]} : vector<64x128xf32> to vector<8x128xf32>
    %281 = arith.truncf %279 : vector<8x32xf32> to vector<8x32xbf16>
    %cst_53 = arith.constant dense<0.000000e+00> : vector<8x128xf32>
    %282 = tpu.matmul %281, %197, %cst_53 {dimension_numbers = #tpu.dot_dimension_numbers<[1], [0], [0], [1], [0, 0, 1, 1], [], []>} : vector<8x32xbf16>, vector<32x128xbf16>, vector<8x128xf32> -> vector<8x128xf32>
    %283 = arith.addf %280, %282 : vector<8x128xf32>
    %284 = math.tanh %283 : vector<8x128xf32>
    %285 = arith.negf %283 : vector<8x128xf32>
    %286 = math.exp %285 : vector<8x128xf32>
    %cst_54 = arith.constant 1.000000e+00 : f32
    %287 = vector.broadcast %cst_54 : f32 to vector<8x128xf32>
    %288 = arith.addf %287, %286 : vector<8x128xf32>
    %289 = arith.divf %287, %288 : vector<8x128xf32>
    %290 = arith.select %5, %284, %289 : vector<8x128xi1>, vector<8x128xf32>
    %291 = vector.extract_strided_slice %290 {offsets = [0, 0], sizes = [8, 32], strides = [1, 1]} : vector<8x128xf32> to vector<8x32xf32>
    %292 = vector.extract_strided_slice %290 {offsets = [0, 32], sizes = [8, 32], strides = [1, 1]} : vector<8x128xf32> to vector<8x32xf32>
    %293 = vector.extract_strided_slice %290 {offsets = [0, 64], sizes = [8, 32], strides = [1, 1]} : vector<8x128xf32> to vector<8x32xf32>
    %294 = vector.extract_strided_slice %290 {offsets = [0, 96], sizes = [8, 32], strides = [1, 1]} : vector<8x128xf32> to vector<8x32xf32>
    %295 = arith.mulf %292, %277 : vector<8x32xf32>
    %296 = arith.mulf %291, %293 : vector<8x32xf32>
    %297 = arith.addf %295, %296 : vector<8x32xf32>
    %298 = math.tanh %297 : vector<8x32xf32>
    %299 = arith.mulf %294, %298 : vector<8x32xf32>
    %300 = vector.extract_strided_slice %196 {offsets = [40, 0], sizes = [8, 128], strides = [1, 1]} : vector<64x128xf32> to vector<8x128xf32>
    %301 = arith.truncf %299 : vector<8x32xf32> to vector<8x32xbf16>
    %cst_55 = arith.constant dense<0.000000e+00> : vector<8x128xf32>
    %302 = tpu.matmul %301, %197, %cst_55 {dimension_numbers = #tpu.dot_dimension_numbers<[1], [0], [0], [1], [0, 0, 1, 1], [], []>} : vector<8x32xbf16>, vector<32x128xbf16>, vector<8x128xf32> -> vector<8x128xf32>
    %303 = arith.addf %300, %302 : vector<8x128xf32>
    %304 = math.tanh %303 : vector<8x128xf32>
    %305 = arith.negf %303 : vector<8x128xf32>
    %306 = math.exp %305 : vector<8x128xf32>
    %cst_56 = arith.constant 1.000000e+00 : f32
    %307 = vector.broadcast %cst_56 : f32 to vector<8x128xf32>
    %308 = arith.addf %307, %306 : vector<8x128xf32>
    %309 = arith.divf %307, %308 : vector<8x128xf32>
    %310 = arith.select %5, %304, %309 : vector<8x128xi1>, vector<8x128xf32>
    %311 = vector.extract_strided_slice %310 {offsets = [0, 0], sizes = [8, 32], strides = [1, 1]} : vector<8x128xf32> to vector<8x32xf32>
    %312 = vector.extract_strided_slice %310 {offsets = [0, 32], sizes = [8, 32], strides = [1, 1]} : vector<8x128xf32> to vector<8x32xf32>
    %313 = vector.extract_strided_slice %310 {offsets = [0, 64], sizes = [8, 32], strides = [1, 1]} : vector<8x128xf32> to vector<8x32xf32>
    %314 = vector.extract_strided_slice %310 {offsets = [0, 96], sizes = [8, 32], strides = [1, 1]} : vector<8x128xf32> to vector<8x32xf32>
    %315 = arith.mulf %312, %297 : vector<8x32xf32>
    %316 = arith.mulf %311, %313 : vector<8x32xf32>
    %317 = arith.addf %315, %316 : vector<8x32xf32>
    %318 = math.tanh %317 : vector<8x32xf32>
    %319 = arith.mulf %314, %318 : vector<8x32xf32>
    %320 = vector.extract_strided_slice %196 {offsets = [48, 0], sizes = [8, 128], strides = [1, 1]} : vector<64x128xf32> to vector<8x128xf32>
    %321 = arith.truncf %319 : vector<8x32xf32> to vector<8x32xbf16>
    %cst_57 = arith.constant dense<0.000000e+00> : vector<8x128xf32>
    %322 = tpu.matmul %321, %197, %cst_57 {dimension_numbers = #tpu.dot_dimension_numbers<[1], [0], [0], [1], [0, 0, 1, 1], [], []>} : vector<8x32xbf16>, vector<32x128xbf16>, vector<8x128xf32> -> vector<8x128xf32>
    %323 = arith.addf %320, %322 : vector<8x128xf32>
    %324 = math.tanh %323 : vector<8x128xf32>
    %325 = arith.negf %323 : vector<8x128xf32>
    %326 = math.exp %325 : vector<8x128xf32>
    %cst_58 = arith.constant 1.000000e+00 : f32
    %327 = vector.broadcast %cst_58 : f32 to vector<8x128xf32>
    %328 = arith.addf %327, %326 : vector<8x128xf32>
    %329 = arith.divf %327, %328 : vector<8x128xf32>
    %330 = arith.select %5, %324, %329 : vector<8x128xi1>, vector<8x128xf32>
    %331 = vector.extract_strided_slice %330 {offsets = [0, 0], sizes = [8, 32], strides = [1, 1]} : vector<8x128xf32> to vector<8x32xf32>
    %332 = vector.extract_strided_slice %330 {offsets = [0, 32], sizes = [8, 32], strides = [1, 1]} : vector<8x128xf32> to vector<8x32xf32>
    %333 = vector.extract_strided_slice %330 {offsets = [0, 64], sizes = [8, 32], strides = [1, 1]} : vector<8x128xf32> to vector<8x32xf32>
    %334 = vector.extract_strided_slice %330 {offsets = [0, 96], sizes = [8, 32], strides = [1, 1]} : vector<8x128xf32> to vector<8x32xf32>
    %335 = arith.mulf %332, %317 : vector<8x32xf32>
    %336 = arith.mulf %331, %333 : vector<8x32xf32>
    %337 = arith.addf %335, %336 : vector<8x32xf32>
    %338 = math.tanh %337 : vector<8x32xf32>
    %339 = arith.mulf %334, %338 : vector<8x32xf32>
    %340 = vector.extract_strided_slice %196 {offsets = [56, 0], sizes = [8, 128], strides = [1, 1]} : vector<64x128xf32> to vector<8x128xf32>
    %341 = arith.truncf %339 : vector<8x32xf32> to vector<8x32xbf16>
    %cst_59 = arith.constant dense<0.000000e+00> : vector<8x128xf32>
    %342 = tpu.matmul %341, %197, %cst_59 {dimension_numbers = #tpu.dot_dimension_numbers<[1], [0], [0], [1], [0, 0, 1, 1], [], []>} : vector<8x32xbf16>, vector<32x128xbf16>, vector<8x128xf32> -> vector<8x128xf32>
    %343 = arith.addf %340, %342 : vector<8x128xf32>
    %344 = math.tanh %343 : vector<8x128xf32>
    %345 = arith.negf %343 : vector<8x128xf32>
    %346 = math.exp %345 : vector<8x128xf32>
    %cst_60 = arith.constant 1.000000e+00 : f32
    %347 = vector.broadcast %cst_60 : f32 to vector<8x128xf32>
    %348 = arith.addf %347, %346 : vector<8x128xf32>
    %349 = arith.divf %347, %348 : vector<8x128xf32>
    %350 = arith.select %5, %344, %349 : vector<8x128xi1>, vector<8x128xf32>
    %351 = vector.extract_strided_slice %350 {offsets = [0, 0], sizes = [8, 32], strides = [1, 1]} : vector<8x128xf32> to vector<8x32xf32>
    %352 = vector.extract_strided_slice %350 {offsets = [0, 32], sizes = [8, 32], strides = [1, 1]} : vector<8x128xf32> to vector<8x32xf32>
    %353 = vector.extract_strided_slice %350 {offsets = [0, 64], sizes = [8, 32], strides = [1, 1]} : vector<8x128xf32> to vector<8x32xf32>
    %354 = vector.extract_strided_slice %350 {offsets = [0, 96], sizes = [8, 32], strides = [1, 1]} : vector<8x128xf32> to vector<8x32xf32>
    %355 = arith.mulf %352, %337 : vector<8x32xf32>
    %356 = arith.mulf %351, %353 : vector<8x32xf32>
    %357 = arith.addf %355, %356 : vector<8x32xf32>
    %358 = math.tanh %357 : vector<8x32xf32>
    %359 = arith.mulf %354, %358 : vector<8x32xf32>
    %360 = arith.truncf %359 : vector<8x32xf32> to vector<8x32xbf16>
    %c0_61 = arith.constant 0 : index
    %c0_62 = arith.constant 0 : index
    %361 = vector.load %arg7[%c0_61, %c0_62] : memref<32x128xbf16, #tpu.memory_space<vmem>>, vector<32x128xbf16>
    %cst_63 = arith.constant dense<0.000000e+00> : vector<8x128xf32>
    %362 = tpu.matmul %360, %361, %cst_63 {dimension_numbers = #tpu.dot_dimension_numbers<[1], [0], [0], [1], [0, 0, 1, 1], [], []>} : vector<8x32xbf16>, vector<32x128xbf16>, vector<8x128xf32> -> vector<8x128xf32>
    %c0_64 = arith.constant 0 : index
    %c0_65 = arith.constant 0 : index
    %363 = vector.load %arg8[%c0_64, %c0_65] : memref<1x128xf32, #tpu.memory_space<vmem>>, vector<1x128xf32>
    %364 = vector.broadcast %363 : vector<1x128xf32> to vector<8x128xf32>
    %365 = arith.addf %362, %364 : vector<8x128xf32>
    %c0_66 = arith.constant 0 : index
    %c0_67 = arith.constant 0 : index
    %366 = vector.load %arg9[%c0_66, %c0_67] : memref<8x128xf32, #tpu.memory_space<vmem>>, vector<8x128xf32>
    tpu.vector_store %arg9[%c0_66, %c0_67], %365 {strides = array<i32>} : memref<8x128xf32, #tpu.memory_space<vmem>>, vector<8x128xf32>,
    return
  }
}

</mosaic_0001>

<llo_original>
// kernel: lstm_model_forward.1
$region0: #{lstm_model_forward.1}
  #allocation0 [shape = 'u32[]', space=smem, size = 0x4, offset = 0x4, fixed_abs, tag = 'smem constant byte address 0x4 - core index']
  #allocation1 [shape = 'u32[144,128]{1,0:T(1,128)}', space=vmem, size = 0x12000, scoped, tag = 'internal scratch']
  #allocation2 [shape = 'bf16[64,32]{1,0:T(8,128)(2,1)}', space=vmem, size = 0x4000, scoped, tag = 'scratch operand']
  %s0 = inlined_call_operand.vmem [shape: bf16[64,16], index: 0, kind: input, shape index: {}]
  %s1 = inlined_call_operand.vmem [shape: bf16[16,128], index: 1, kind: input, shape index: {}]
  %s2 = inlined_call_operand.vmem [shape: f32[1,128], index: 2, kind: input, shape index: {}]
  %s3 = inlined_call_operand.vmem [shape: bf16[32,128], index: 3, kind: input, shape index: {}]
  %s4 = inlined_call_operand.vmem [shape: bf16[32,128], index: 4, kind: input, shape index: {}]
  %s5 = inlined_call_operand.vmem [shape: bf16[32,128], index: 5, kind: input, shape index: {}]
  %s6 = inlined_call_operand.vmem [shape: f32[1,128], index: 6, kind: input, shape index: {}]
  %s7 = inlined_call_operand.vmem [shape: bf16[32,128], index: 7, kind: input, shape index: {}]
  %s8 = inlined_call_operand.vmem [shape: f32[1,128], index: 8, kind: input, shape index: {}]
  %s9 = inlined_call_operand.vmem [shape: f32[8,128], index: 9, kind: output, shape index: {}]
  %s10 = sld [smem:[#allocation0]]
  $region46: #{lstm_model_forward.1} parent=0
    _
  %s12 = ssub.s32 1, %s10
  %s13 = scalar_select 0, %s12, %s10
  // Predicated region
  $region2: #{lstm_model_forward.1} parent=0 // pred_check
    _
  $region3: #{lstm_model_forward.1} parent=0 // pred_check_branch
    %15 = sbr.rel (0) target = $region5
  $region4: #{lstm_model_forward.1} parent=0 // pred_region
    _
  $region5: #{lstm_model_forward.1} parent=0 // pred_fallthru
    _
  // Predicated region
  $region6: #{lstm_model_forward.1} parent=0 // pred_check
    _
  $region7: #{lstm_model_forward.1} parent=0 // pred_check_branch
    %17 = sbr.rel (0) target = $region9
  $region8: #{lstm_model_forward.1} parent=0 // pred_region
    _
  $region9: #{lstm_model_forward.1} parent=0 // pred_fallthru
    _
  // Predicated region
  $region10: #{lstm_model_forward.1} parent=0 // pred_check
    _
  $region11: #{lstm_model_forward.1} parent=0 // pred_check_branch
    %19 = sbr.rel (0) target = $region13
  $region12: #{lstm_model_forward.1} parent=0 // pred_region
    _
  $region13: #{lstm_model_forward.1} parent=0 // pred_fallthru
    _
  // Predicated region
  $region14: #{lstm_model_forward.1} parent=0 // pred_check
    _
  $region15: #{lstm_model_forward.1} parent=0 // pred_check_branch
    %21 = sbr.rel (0) target = $region17
  $region16: #{lstm_model_forward.1} parent=0 // pred_region
    _
  $region17: #{lstm_model_forward.1} parent=0 // pred_fallthru
    _
  // Predicated region
  $region18: #{lstm_model_forward.1} parent=0 // pred_check
    _
  $region19: #{lstm_model_forward.1} parent=0 // pred_check_branch
    %23 = sbr.rel (0) target = $region21
  $region20: #{lstm_model_forward.1} parent=0 // pred_region
    _
  $region21: #{lstm_model_forward.1} parent=0 // pred_fallthru
    _
  // Predicated region
  $region22: #{lstm_model_forward.1} parent=0 // pred_check
    _
  $region23: #{lstm_model_forward.1} parent=0 // pred_check_branch
    %25 = sbr.rel (0) target = $region25
  $region24: #{lstm_model_forward.1} parent=0 // pred_region
    _
  $region25: #{lstm_model_forward.1} parent=0 // pred_fallthru
    _
  // Predicated region
  $region26: #{lstm_model_forward.1} parent=0 // pred_check
    _
  $region27: #{lstm_model_forward.1} parent=0 // pred_check_branch
    %27 = sbr.rel (0) target = $region29
  $region28: #{lstm_model_forward.1} parent=0 // pred_region
    _
  $region29: #{lstm_model_forward.1} parent=0 // pred_fallthru
    _
  // Predicated region
  $region30: #{lstm_model_forward.1} parent=0 // pred_check
    _
  $region31: #{lstm_model_forward.1} parent=0 // pred_check_branch
    %29 = sbr.rel (0) target = $region33
  $region32: #{lstm_model_forward.1} parent=0 // pred_region
    _
  $region33: #{lstm_model_forward.1} parent=0 // pred_fallthru
    _
  // Predicated region
  $region34: #{lstm_model_forward.1} parent=0 // pred_check
    _
  $region35: #{lstm_model_forward.1} parent=0 // pred_check_branch
    %31 = sbr.rel (0) target = $region37
  $region36: #{lstm_model_forward.1} parent=0 // pred_region
    _
  $region37: #{lstm_model_forward.1} parent=0 // pred_fallthru
    _
  %v33 = vlaneseq
  %v34 = vand.u32 %v33, 127
  %vm35 = vcmp.ge.s32.totalorder %v34, 64
  %vm36 = vcmp.lt.s32.totalorder %v34, 96
  %vm37 = vmand %vm35, %vm36
  %v38 = vld [vmem:[%s0] sm:$0xf]
  %v39 = vld [vmem:[%s0 + $0x4] sm:$0xf]
  %v40 = vld [vmem:[%s0 + $0x8] sm:$0xf]
  %v41 = vld [vmem:[%s0 + $0xc] sm:$0xf]
  %v42 = vld [vmem:[%s0 + $0x10] sm:$0xf]
  %v43 = vld [vmem:[%s0 + $0x14] sm:$0xf]
  %v44 = vld [vmem:[%s0 + $0x18] sm:$0xf]
  %v45 = vld [vmem:[%s0 + $0x1c] sm:$0xf]
  %v46 = vld [vmem:[%s1] sm:$0xf]
  %v47 = vld [vmem:[%s1 + $0x4] sm:$0xf]
  %v48 = vld [vmem:[%s2] sm:$0x1]
  %v50 = vlaneseq
  %v51 = vshrl.u32 %v50, 7
  %v52 = vsub.s32 0, %v51
  %v53 = vrot.slane %v48, %v52
  %v63 = vunpack.c.l.b16 %v38
  %v64 = vunpack.c.l.b16 %v39
  %v65 = vunpack.c.l.b16 %v40
  %v66 = vunpack.c.l.b16 %v41
  %v67 = vunpack.c.l.b16 %v42
  %v68 = vunpack.c.l.b16 %v43
  %v69 = vunpack.c.l.b16 %v44
  %v70 = vunpack.c.l.b16 %v45
  %v71 = vpack.c.b16 %v64, %v63
  %v72 = vpack.c.b16 %v66, %v65
  %v73 = vpack.c.b16 %v68, %v67
  %v74 = vpack.c.b16 %v70, %v69
  %v77 = vunpack.c.l.b16 %v46
  %v78 = vunpack.c.l.b16 %v47
  %v79 = vpack.c.b16 %v78, %v77
  %vm81 = vcmask 130048
  %v83 = vsel %vm81, %v71, 0
  %v86 = vsel %vm81, %v72, 0
  %v89 = vsel %vm81, %v73, 0
  %v92 = vsel %vm81, %v74, 0
  %94 = vmatprep.subr.bf16.mxu0 0
  %95 = vmatpush1.bf16.msra.mxu0 0
  %96 = vmatprep.subr.bf16.mxu0 0
  %97 = vmatpush1.bf16.msra.mxu0 0
  %98 = vmatprep.subr.bf16.mxu0 0
  %99 = vmatpush1.bf16.msra.mxu0 0
  %100 = vmatprep.subr.bf16.mxu0 0
  %101 = vmatpush1.bf16.msra.mxu0 0
  %102 = vmatprep.subr.bf16.mxu0 0
  %103 = vmatpush1.bf16.msra.mxu0 0
  %104 = vmatprep.subr.bf16.mxu0 0
  %105 = vmatpush1.bf16.msra.mxu0 0
  %106 = vmatprep.subr.bf16.mxu0 0
  %107 = vmatpush1.bf16.msra.mxu0 0
  %108 = vmatprep.subr.bf16.mxu0 0
  %109 = vmatpush1.bf16.msra.mxu0 %v79
  %110 = vmatprep.subr.bf16.mxu0 0
  %111 = vmatpush2.bf16.msra.mxu0 0
  %112 = vmatprep.subr.bf16.mxu0 0
  %113 = vmatpush2.bf16.msra.mxu0 0
  %114 = vmatprep.subr.bf16.mxu0 0
  %115 = vmatpush2.bf16.msra.mxu0 0
  %116 = vmatprep.subr.bf16.mxu0 0
  %117 = vmatpush2.bf16.msra.mxu0 0
  %118 = vmatprep.subr.bf16.mxu0 0
  %119 = vmatpush2.bf16.msra.mxu0 0
  %120 = vmatprep.subr.bf16.mxu0 0
  %121 = vmatpush2.bf16.msra.mxu0 0
  %122 = vmatprep.subr.bf16.mxu0 0
  %123 = vmatpush2.bf16.msra.mxu0 0
  %124 = vmatprep.subr.bf16.mxu0 0
  %125 = vmatpush2.bf16.msra.mxu0 0
  %126 = vmatprep.mubr.bf16.mxu0 0
  %127 = vmatmul.mubr.bf16.gmra.mxu0 %v83
  %v128 = vpop.f32.mrf.mxu0
  %v129 = vadd.f32 %v53, %v128
  %v130 = vpop.f32.mrf.mxu0
  %v131 = vpop.f32.mrf.mxu0
  %v132 = vadd.f32 %v53, %v131
  %v133 = vpop.f32.mrf.mxu0
  %134 = vmatprep.mubr.bf16.mxu0 0
  %135 = vmatmul.mubr.bf16.gmra.mxu0 %v86
  %v136 = vpop.f32.mrf.mxu0
  %v137 = vadd.f32 %v53, %v136
  %v138 = vpop.f32.mrf.mxu0
  %v139 = vpop.f32.mrf.mxu0
  %v140 = vadd.f32 %v53, %v139
  %v141 = vpop.f32.mrf.mxu0
  %142 = vmatprep.mubr.bf16.mxu0 0
  %143 = vmatmul.mubr.bf16.gmra.mxu0 %v89
  %v144 = vpop.f32.mrf.mxu0
  %v145 = vadd.f32 %v53, %v144
  %v146 = vpop.f32.mrf.mxu0
  %v147 = vpop.f32.mrf.mxu0
  %v148 = vadd.f32 %v53, %v147
  %v149 = vpop.f32.mrf.mxu0
  %150 = vmatprep.mubr.bf16.mxu0 0
  %151 = vmatmul.mubr.bf16.gmra.mxu0 %v92
  %v152 = vpop.f32.mrf.mxu0
  %v153 = vadd.f32 %v53, %v152
  %v154 = vpop.f32.mrf.mxu0
  %v155 = vpop.f32.mrf.mxu0
  %v156 = vadd.f32 %v53, %v155
  %v157 = vpop.f32.mrf.mxu0
  %158 = vdwg.mxu0
  %v159 = vld [vmem:[%s3] sm:$0xf]
  %v160 = vld [vmem:[%s3 + $0x4] sm:$0xf]
  %v161 = vld [vmem:[%s3 + $0x8] sm:$0xf]
  %v162 = vld [vmem:[%s3 + $0xc] sm:$0xf]
  %v167 = vunpack.c.l.b16 %v159
  %v168 = vunpack.c.l.b16 %v160
  %v169 = vunpack.c.l.b16 %v161
  %v170 = vunpack.c.l.b16 %v162
  %v171 = vpack.c.b16 %v168, %v167
  %v172 = vpack.c.b16 %v170, %v169
  %vm175 = vcmask 261120
  %v177 = vsel %vm175, 0, 0
  %179 = vmatprep.subr.bf16.mxu0 0
  %180 = vmatpush1.bf16.msra.mxu0 0
  %181 = vmatprep.subr.bf16.mxu0 0
  %182 = vmatpush1.bf16.msra.mxu0 0
  %183 = vmatprep.subr.bf16.mxu0 0
  %184 = vmatpush1.bf16.msra.mxu0 0
  %185 = vmatprep.subr.bf16.mxu0 0
  %186 = vmatpush1.bf16.msra.mxu0 0
  %187 = vmatprep.subr.bf16.mxu0 0
  %188 = vmatpush1.bf16.msra.mxu0 0
  %189 = vmatprep.subr.bf16.mxu0 0
  %190 = vmatpush1.bf16.msra.mxu0 0
  %191 = vmatprep.subr.bf16.mxu0 0
  %192 = vmatpush1.bf16.msra.mxu0 %v172
  %193 = vmatprep.subr.bf16.mxu0 0
  %194 = vmatpush1.bf16.msra.mxu0 %v171
  %195 = vmatprep.subr.bf16.mxu0 0
  %196 = vmatpush2.bf16.msra.mxu0 0
  %197 = vmatprep.subr.bf16.mxu0 0
  %198 = vmatpush2.bf16.msra.mxu0 0
  %199 = vmatprep.subr.bf16.mxu0 0
  %200 = vmatpush2.bf16.msra.mxu0 0
  %201 = vmatprep.subr.bf16.mxu0 0
  %202 = vmatpush2.bf16.msra.mxu0 0
  %203 = vmatprep.subr.bf16.mxu0 0
  %204 = vmatpush2.bf16.msra.mxu0 0
  %205 = vmatprep.subr.bf16.mxu0 0
  %206 = vmatpush2.bf16.msra.mxu0 0
  %207 = vmatprep.subr.bf16.mxu0 0
  %208 = vmatpush2.bf16.msra.mxu0 0
  %209 = vmatprep.subr.bf16.mxu0 0
  %210 = vmatpush2.bf16.msra.mxu0 0
  %211 = vmatprep.mubr.bf16.mxu0 0
  %212 = vmatmul.mubr.bf16.gmra.mxu0 %v177
  %v213 = vpop.f32.mrf.mxu0
  %v214 = vadd.f32 0.0, %v213
  %v215 = vpop.f32.mrf.mxu0
  %v216 = vpop.f32.mrf.mxu0
  %v217 = vpop.f32.mrf.mxu0
  %218 = vdwg.mxu0
  %v219 = vadd.f32 %v129, %v214
  %v220 = vtanh.pop %v219
  %v221 = vxor.u32 %v219, 2147483648
  %v222 = vmul.f32 %v221, 1.442695
  %v223 = vpow.pop %v222
  %v224 = vadd.f32 %v223, 1.0
  %v225 = vrcp.pop %v224
  %v226 = vmul.f32 1.0, %v225
  %v227 = vsel %vm37, %v220, %v226
  %v228 = vmul.f32 %v227, 0.0
  %230 = vrot.lane.b32.xlu0 %v227, 64
  %v231 = vpop.permute.xlu0 %230
  %v233 = vmul.f32 %v227, %v231
  %235 = vrot.lane.b32.xlu0 %v233, 32
  %v236 = vpop.permute.xlu0 %235
  %v238 = vadd.f32 %v228, %v236
  %v239 = vtanh.pop %v238
  %241 = vrot.lane.b32.xlu0 %v239, 64
  %v242 = vpop.permute.xlu0 %241
  %v244 = vmul.f32 %v227, %v242
  %v245 = vpack.c.bf16 %v244, %v244
  %v247 = vunpack.c.l.b16 %v245
  %v248 = vpack.c.b16 %v247, %v247
  %249 = vrot.lane.b32.xlu0 %v248, 32
  %v250 = vpop.permute.xlu0 %249
  %vm252 = vcmask 257024
  %253 = vst.msk [vmem:[#allocation2] sm:$0xf] %vm252, %v250
  %254 = vrot.lane.b32.xlu0 %v245, 32
  %v255 = vpop.permute.xlu0 %254
  %v257 = vsel %vm175, %v255, 0
  %259 = vmatprep.subr.bf16.mxu0 0
  %260 = vmatpush1.bf16.msra.mxu0 0
  %261 = vmatprep.subr.bf16.mxu0 0
  %262 = vmatpush1.bf16.msra.mxu0 0
  %263 = vmatprep.subr.bf16.mxu0 0
  %264 = vmatpush1.bf16.msra.mxu0 0
  %265 = vmatprep.subr.bf16.mxu0 0
  %266 = vmatpush1.bf16.msra.mxu0 0
  %267 = vmatprep.subr.bf16.mxu0 0
  %268 = vmatpush1.bf16.msra.mxu0 0
  %269 = vmatprep.subr.bf16.mxu0 0
  %270 = vmatpush1.bf16.msra.mxu0 0
  %271 = vmatprep.subr.bf16.mxu0 0
  %272 = vmatpush1.bf16.msra.mxu0 %v172
  %273 = vmatprep.subr.bf16.mxu0 0
  %274 = vmatpush1.bf16.msra.mxu0 %v171
  %275 = vmatprep.subr.bf16.mxu0 0
  %276 = vmatpush2.bf16.msra.mxu0 0
  %277 = vmatprep.subr.bf16.mxu0 0
  %278 = vmatpush2.bf16.msra.mxu0 0
  %279 = vmatprep.subr.bf16.mxu0 0
  %280 = vmatpush2.bf16.msra.mxu0 0
  %281 = vmatprep.subr.bf16.mxu0 0
  %282 = vmatpush2.bf16.msra.mxu0 0
  %283 = vmatprep.subr.bf16.mxu0 0
  %284 = vmatpush2.bf16.msra.mxu0 0
  %285 = vmatprep.subr.bf16.mxu0 0
  %286 = vmatpush2.bf16.msra.mxu0 0
  %287 = vmatprep.subr.bf16.mxu0 0
  %288 = vmatpush2.bf16.msra.mxu0 0
  %289 = vmatprep.subr.bf16.mxu0 0
  %290 = vmatpush2.bf16.msra.mxu0 0
  %291 = vmatprep.mubr.bf16.mxu0 0
  %292 = vmatmul.mubr.bf16.gmra.mxu0 %v257
  %v293 = vpop.f32.mrf.mxu0
  %v294 = vadd.f32 0.0, %v293
  %v295 = vpop.f32.mrf.mxu0
  %v296 = vpop.f32.mrf.mxu0
  %v297 = vpop.f32.mrf.mxu0
  %298 = vdwg.mxu0
  %v299 = vadd.f32 %v132, %v294
  %v300 = vtanh.pop %v299
  %v301 = vxor.u32 %v299, 2147483648
  %v302 = vmul.f32 %v301, 1.442695
  %v303 = vpow.pop %v302
  %v304 = vadd.f32 %v303, 1.0
  %v305 = vrcp.pop %v304
  %v306 = vmul.f32 1.0, %v305
  %v307 = vsel %vm37, %v300, %v306
  %v308 = vmul.f32 %v307, %v238
  %310 = vrot.lane.b32.xlu0 %v307, 64
  %v311 = vpop.permute.xlu0 %310
  %v313 = vmul.f32 %v307, %v311
  %315 = vrot.lane.b32.xlu0 %v313, 32
  %v316 = vpop.permute.xlu0 %315
  %v318 = vadd.f32 %v308, %v316
  %v319 = vtanh.pop %v318
  %321 = vrot.lane.b32.xlu0 %v319, 64
  %v322 = vpop.permute.xlu0 %321
  %v324 = vmul.f32 %v307, %v322
  %v325 = vpack.c.bf16 %v324, %v324
  %v327 = vunpack.c.l.b16 %v325
  %v328 = vpack.c.b16 %v327, %v327
  %329 = vrot.lane.b32.xlu0 %v328, 32
  %v330 = vpop.permute.xlu0 %329
  %332 = vst.msk [vmem:[#allocation2 + $0x4] sm:$0xf] %vm252, %v330
  %333 = vrot.lane.b32.xlu0 %v325, 32
  %v334 = vpop.permute.xlu0 %333
  %v336 = vsel %vm175, %v334, 0
  %338 = vmatprep.subr.bf16.mxu0 0
  %339 = vmatpush1.bf16.msra.mxu0 0
  %340 = vmatprep.subr.bf16.mxu0 0
  %341 = vmatpush1.bf16.msra.mxu0 0
  %342 = vmatprep.subr.bf16.mxu0 0
  %343 = vmatpush1.bf16.msra.mxu0 0
  %344 = vmatprep.subr.bf16.mxu0 0
  %345 = vmatpush1.bf16.msra.mxu0 0
  %346 = vmatprep.subr.bf16.mxu0 0
  %347 = vmatpush1.bf16.msra.mxu0 0
  %348 = vmatprep.subr.bf16.mxu0 0
  %349 = vmatpush1.bf16.msra.mxu0 0
  %350 = vmatprep.subr.bf16.mxu0 0
  %351 = vmatpush1.bf16.msra.mxu0 %v172
  %352 = vmatprep.subr.bf16.mxu0 0
  %353 = vmatpush1.bf16.msra.mxu0 %v171
  %354 = vmatprep.subr.bf16.mxu0 0
  %355 = vmatpush2.bf16.msra.mxu0 0
  %356 = vmatprep.subr.bf16.mxu0 0
  %357 = vmatpush2.bf16.msra.mxu0 0
  %358 = vmatprep.subr.bf16.mxu0 0
  %359 = vmatpush2.bf16.msra.mxu0 0
  %360 = vmatprep.subr.bf16.mxu0 0
  %361 = vmatpush2.bf16.msra.mxu0 0
  %362 = vmatprep.subr.bf16.mxu0 0
  %363 = vmatpush2.bf16.msra.mxu0 0
  %364 = vmatprep.subr.bf16.mxu0 0
  %365 = vmatpush2.bf16.msra.mxu0 0
  %366 = vmatprep.subr.bf16.mxu0 0
  %367 = vmatpush2.bf16.msra.mxu0 0
  %368 = vmatprep.subr.bf16.mxu0 0
  %369 = vmatpush2.bf16.msra.mxu0 0
  %370 = vmatprep.mubr.bf16.mxu0 0
  %371 = vmatmul.mubr.bf16.gmra.mxu0 %v336
  %v372 = vpop.f32.mrf.mxu0
  %v373 = vadd.f32 0.0, %v372
  %v374 = vpop.f32.mrf.mxu0
  %v375 = vpop.f32.mrf.mxu0
  %v376 = vpop.f32.mrf.mxu0
  %377 = vdwg.mxu0
  %v378 = vadd.f32 %v137, %v373
  %v379 = vtanh.pop %v378
  %v380 = vxor.u32 %v378, 2147483648
  %v381 = vmul.f32 %v380, 1.442695
  %v382 = vpow.pop %v381
  %v383 = vadd.f32 %v382, 1.0
  %v384 = vrcp.pop %v383
  %v385 = vmul.f32 1.0, %v384
  %v386 = vsel %vm37, %v379, %v385
  %v387 = vmul.f32 %v386, %v318
  %389 = vrot.lane.b32.xlu0 %v386, 64
  %v390 = vpop.permute.xlu0 %389
  %v392 = vmul.f32 %v386, %v390
  %394 = vrot.lane.b32.xlu0 %v392, 32
  %v395 = vpop.permute.xlu0 %394
  %v397 = vadd.f32 %v387, %v395
  %v398 = vtanh.pop %v397
  %400 = vrot.lane.b32.xlu0 %v398, 64
  %v401 = vpop.permute.xlu0 %400
  %v403 = vmul.f32 %v386, %v401
  %v404 = vpack.c.bf16 %v403, %v403
  %v406 = vunpack.c.l.b16 %v404
  %v407 = vpack.c.b16 %v406, %v406
  %408 = vrot.lane.b32.xlu0 %v407, 32
  %v409 = vpop.permute.xlu0 %408
  %411 = vst.msk [vmem:[#allocation2 + $0x8] sm:$0xf] %vm252, %v409
  %412 = vrot.lane.b32.xlu0 %v404, 32
  %v413 = vpop.permute.xlu0 %412
  %v415 = vsel %vm175, %v413, 0
  %417 = vmatprep.subr.bf16.mxu0 0
  %418 = vmatpush1.bf16.msra.mxu0 0
  %419 = vmatprep.subr.bf16.mxu0 0
  %420 = vmatpush1.bf16.msra.mxu0 0
  %421 = vmatprep.subr.bf16.mxu0 0
  %422 = vmatpush1.bf16.msra.mxu0 0
  %423 = vmatprep.subr.bf16.mxu0 0
  %424 = vmatpush1.bf16.msra.mxu0 0
  %425 = vmatprep.subr.bf16.mxu0 0
  %426 = vmatpush1.bf16.msra.mxu0 0
  %427 = vmatprep.subr.bf16.mxu0 0
  %428 = vmatpush1.bf16.msra.mxu0 0
  %429 = vmatprep.subr.bf16.mxu0 0
  %430 = vmatpush1.bf16.msra.mxu0 %v172
  %431 = vmatprep.subr.bf16.mxu0 0
  %432 = vmatpush1.bf16.msra.mxu0 %v171
  %433 = vmatprep.subr.bf16.mxu0 0
  %434 = vmatpush2.bf16.msra.mxu0 0
  %435 = vmatprep.subr.bf16.mxu0 0
  %436 = vmatpush2.bf16.msra.mxu0 0
  %437 = vmatprep.subr.bf16.mxu0 0
  %438 = vmatpush2.bf16.msra.mxu0 0
  %439 = vmatprep.subr.bf16.mxu0 0
  %440 = vmatpush2.bf16.msra.mxu0 0
  %441 = vmatprep.subr.bf16.mxu0 0
  %442 = vmatpush2.bf16.msra.mxu0 0
  %443 = vmatprep.subr.bf16.mxu0 0
  %444 = vmatpush2.bf16.msra.mxu0 0
  %445 = vmatprep.subr.bf16.mxu0 0
  %446 = vmatpush2.bf16.msra.mxu0 0
  %447 = vmatprep.subr.bf16.mxu0 0
  %448 = vmatpush2.bf16.msra.mxu0 0
  %449 = vmatprep.mubr.bf16.mxu0 0
  %450 = vmatmul.mubr.bf16.gmra.mxu0 %v415
  %v451 = vpop.f32.mrf.mxu0
  %v452 = vadd.f32 0.0, %v451
  %v453 = vpop.f32.mrf.mxu0
  %v454 = vpop.f32.mrf.mxu0
  %v455 = vpop.f32.mrf.mxu0
  %456 = vdwg.mxu0
  %v457 = vadd.f32 %v140, %v452
  %v458 = vtanh.pop %v457
  %v459 = vxor.u32 %v457, 2147483648
  %v460 = vmul.f32 %v459, 1.442695
  %v461 = vpow.pop %v460
  %v462 = vadd.f32 %v461, 1.0
  %v463 = vrcp.pop %v462
  %v464 = vmul.f32 1.0, %v463
  %v465 = vsel %vm37, %v458, %v464
  %v466 = vmul.f32 %v465, %v397
  %468 = vrot.lane.b32.xlu0 %v465, 64
  %v469 = vpop.permute.xlu0 %468
  %v471 = vmul.f32 %v465, %v469
  %473 = vrot.lane.b32.xlu0 %v471, 32
  %v474 = vpop.permute.xlu0 %473
  %v476 = vadd.f32 %v466, %v474
  %v477 = vtanh.pop %v476
  %479 = vrot.lane.b32.xlu0 %v477, 64
  %v480 = vpop.permute.xlu0 %479
  %v482 = vmul.f32 %v465, %v480
  %v483 = vpack.c.bf16 %v482, %v482
  %v485 = vunpack.c.l.b16 %v483
  %v486 = vpack.c.b16 %v485, %v485
  %487 = vrot.lane.b32.xlu0 %v486, 32
  %v488 = vpop.permute.xlu0 %487
  %490 = vst.msk [vmem:[#allocation2 + $0xc] sm:$0xf] %vm252, %v488
  %491 = vrot.lane.b32.xlu0 %v483, 32
  %v492 = vpop.permute.xlu0 %491
  %v494 = vsel %vm175, %v492, 0
  %496 = vmatprep.subr.bf16.mxu0 0
  %497 = vmatpush1.bf16.msra.mxu0 0
  %498 = vmatprep.subr.bf16.mxu0 0
  %499 = vmatpush1.bf16.msra.mxu0 0
  %500 = vmatprep.subr.bf16.mxu0 0
  %501 = vmatpush1.bf16.msra.mxu0 0
  %502 = vmatprep.subr.bf16.mxu0 0
  %503 = vmatpush1.bf16.msra.mxu0 0
  %504 = vmatprep.subr.bf16.mxu0 0
  %505 = vmatpush1.bf16.msra.mxu0 0
  %506 = vmatprep.subr.bf16.mxu0 0
  %507 = vmatpush1.bf16.msra.mxu0 0
  %508 = vmatprep.subr.bf16.mxu0 0
  %509 = vmatpush1.bf16.msra.mxu0 %v172
  %510 = vmatprep.subr.bf16.mxu0 0
  %511 = vmatpush1.bf16.msra.mxu0 %v171
  %512 = vmatprep.subr.bf16.mxu0 0
  %513 = vmatpush2.bf16.msra.mxu0 0
  %514 = vmatprep.subr.bf16.mxu0 0
  %515 = vmatpush2.bf16.msra.mxu0 0
  %516 = vmatprep.subr.bf16.mxu0 0
  %517 = vmatpush2.bf16.msra.mxu0 0
  %518 = vmatprep.subr.bf16.mxu0 0
  %519 = vmatpush2.bf16.msra.mxu0 0
  %520 = vmatprep.subr.bf16.mxu0 0
  %521 = vmatpush2.bf16.msra.mxu0 0
  %522 = vmatprep.subr.bf16.mxu0 0
  %523 = vmatpush2.bf16.msra.mxu0 0
  %524 = vmatprep.subr.bf16.mxu0 0
  %525 = vmatpush2.bf16.msra.mxu0 0
  %526 = vmatprep.subr.bf16.mxu0 0
  %527 = vmatpush2.bf16.msra.mxu0 0
  %528 = vmatprep.mubr.bf16.mxu0 0
  %529 = vmatmul.mubr.bf16.gmra.mxu0 %v494
  %v530 = vpop.f32.mrf.mxu0
  %v531 = vadd.f32 0.0, %v530
  %v532 = vpop.f32.mrf.mxu0
  %v533 = vpop.f32.mrf.mxu0
  %v534 = vpop.f32.mrf.mxu0
  %535 = vdwg.mxu0
  %v536 = vadd.f32 %v145, %v531
  %v537 = vtanh.pop %v536
  %v538 = vxor.u32 %v536, 2147483648
  %v539 = vmul.f32 %v538, 1.442695
  %v540 = vpow.pop %v539
  %v541 = vadd.f32 %v540, 1.0
  %v542 = vrcp.pop %v541
  %v543 = vmul.f32 1.0, %v542
  %v544 = vsel %vm37, %v537, %v543
  %v545 = vmul.f32 %v544, %v476
  %547 = vrot.lane.b32.xlu0 %v544, 64
  %v548 = vpop.permute.xlu0 %547
  %v550 = vmul.f32 %v544, %v548
  %552 = vrot.lane.b32.xlu0 %v550, 32
  %v553 = vpop.permute.xlu0 %552
  %v555 = vadd.f32 %v545, %v553
  %v556 = vtanh.pop %v555
  %558 = vrot.lane.b32.xlu0 %v556, 64
  %v559 = vpop.permute.xlu0 %558
  %v561 = vmul.f32 %v544, %v559
  %v562 = vpack.c.bf16 %v561, %v561
  %v564 = vunpack.c.l.b16 %v562
  %v565 = vpack.c.b16 %v564, %v564
  %566 = vrot.lane.b32.xlu0 %v565, 32
  %v567 = vpop.permute.xlu0 %566
  %569 = vst.msk [vmem:[#allocation2 + $0x10] sm:$0xf] %vm252, %v567
  %570 = vrot.lane.b32.xlu0 %v562, 32
  %v571 = vpop.permute.xlu0 %570
  %v573 = vsel %vm175, %v571, 0
  %575 = vmatprep.subr.bf16.mxu0 0
  %576 = vmatpush1.bf16.msra.mxu0 0
  %577 = vmatprep.subr.bf16.mxu0 0
  %578 = vmatpush1.bf16.msra.mxu0 0
  %579 = vmatprep.subr.bf16.mxu0 0
  %580 = vmatpush1.bf16.msra.mxu0 0
  %581 = vmatprep.subr.bf16.mxu0 0
  %582 = vmatpush1.bf16.msra.mxu0 0
  %583 = vmatprep.subr.bf16.mxu0 0
  %584 = vmatpush1.bf16.msra.mxu0 0
  %585 = vmatprep.subr.bf16.mxu0 0
  %586 = vmatpush1.bf16.msra.mxu0 0
  %587 = vmatprep.subr.bf16.mxu0 0
  %588 = vmatpush1.bf16.msra.mxu0 %v172
  %589 = vmatprep.subr.bf16.mxu0 0
  %590 = vmatpush1.bf16.msra.mxu0 %v171
  %591 = vmatprep.subr.bf16.mxu0 0
  %592 = vmatpush2.bf16.msra.mxu0 0
  %593 = vmatprep.subr.bf16.mxu0 0
  %594 = vmatpush2.bf16.msra.mxu0 0
  %595 = vmatprep.subr.bf16.mxu0 0
  %596 = vmatpush2.bf16.msra.mxu0 0
  %597 = vmatprep.subr.bf16.mxu0 0
  %598 = vmatpush2.bf16.msra.mxu0 0
  %599 = vmatprep.subr.bf16.mxu0 0
  %600 = vmatpush2.bf16.msra.mxu0 0
  %601 = vmatprep.subr.bf16.mxu0 0
  %602 = vmatpush2.bf16.msra.mxu0 0
  %603 = vmatprep.subr.bf16.mxu0 0
  %604 = vmatpush2.bf16.msra.mxu0 0
  %605 = vmatprep.subr.bf16.mxu0 0
  %606 = vmatpush2.bf16.msra.mxu0 0
  %607 = vmatprep.mubr.bf16.mxu0 0
  %608 = vmatmul.mubr.bf16.gmra.mxu0 %v573
  %v609 = vpop.f32.mrf.mxu0
  %v610 = vadd.f32 0.0, %v609
  %v611 = vpop.f32.mrf.mxu0
  %v612 = vpop.f32.mrf.mxu0
  %v613 = vpop.f32.mrf.mxu0
  %614 = vdwg.mxu0
  %v615 = vadd.f32 %v148, %v610
  %v616 = vtanh.pop %v615
  %v617 = vxor.u32 %v615, 2147483648
  %v618 = vmul.f32 %v617, 1.442695
  %v619 = vpow.pop %v618
  %v620 = vadd.f32 %v619, 1.0
  %v621 = vrcp.pop %v620
  %v622 = vmul.f32 1.0, %v621
  %v623 = vsel %vm37, %v616, %v622
  %v624 = vmul.f32 %v623, %v555
  %626 = vrot.lane.b32.xlu0 %v623, 64
  %v627 = vpop.permute.xlu0 %626
  %v629 = vmul.f32 %v623, %v627
  %631 = vrot.lane.b32.xlu0 %v629, 32
  %v632 = vpop.permute.xlu0 %631
  %v634 = vadd.f32 %v624, %v632
  %v635 = vtanh.pop %v634
  %637 = vrot.lane.b32.xlu0 %v635, 64
  %v638 = vpop.permute.xlu0 %637
  %v640 = vmul.f32 %v623, %v638
  %v641 = vpack.c.bf16 %v640, %v640
  %v643 = vunpack.c.l.b16 %v641
  %v644 = vpack.c.b16 %v643, %v643
  %645 = vrot.lane.b32.xlu0 %v644, 32
  %v646 = vpop.permute.xlu0 %645
  %648 = vst.msk [vmem:[#allocation2 + $0x14] sm:$0xf] %vm252, %v646
  %649 = vrot.lane.b32.xlu0 %v641, 32
  %v650 = vpop.permute.xlu0 %649
  %v652 = vsel %vm175, %v650, 0
  %654 = vmatprep.subr.bf16.mxu0 0
  %655 = vmatpush1.bf16.msra.mxu0 0
  %656 = vmatprep.subr.bf16.mxu0 0
  %657 = vmatpush1.bf16.msra.mxu0 0
  %658 = vmatprep.subr.bf16.mxu0 0
  %659 = vmatpush1.bf16.msra.mxu0 0
  %660 = vmatprep.subr.bf16.mxu0 0
  %661 = vmatpush1.bf16.msra.mxu0 0
  %662 = vmatprep.subr.bf16.mxu0 0
  %663 = vmatpush1.bf16.msra.mxu0 0
  %664 = vmatprep.subr.bf16.mxu0 0
  %665 = vmatpush1.bf16.msra.mxu0 0
  %666 = vmatprep.subr.bf16.mxu0 0
  %667 = vmatpush1.bf16.msra.mxu0 %v172
  %668 = vmatprep.subr.bf16.mxu0 0
  %669 = vmatpush1.bf16.msra.mxu0 %v171
  %670 = vmatprep.subr.bf16.mxu0 0
  %671 = vmatpush2.bf16.msra.mxu0 0
  %672 = vmatprep.subr.bf16.mxu0 0
  %673 = vmatpush2.bf16.msra.mxu0 0
  %674 = vmatprep.subr.bf16.mxu0 0
  %675 = vmatpush2.bf16.msra.mxu0 0
  %676 = vmatprep.subr.bf16.mxu0 0
  %677 = vmatpush2.bf16.msra.mxu0 0
  %678 = vmatprep.subr.bf16.mxu0 0
  %679 = vmatpush2.bf16.msra.mxu0 0
  %680 = vmatprep.subr.bf16.mxu0 0
  %681 = vmatpush2.bf16.msra.mxu0 0
  %682 = vmatprep.subr.bf16.mxu0 0
  %683 = vmatpush2.bf16.msra.mxu0 0
  %684 = vmatprep.subr.bf16.mxu0 0
  %685 = vmatpush2.bf16.msra.mxu0 0
  %686 = vmatprep.mubr.bf16.mxu0 0
  %687 = vmatmul.mubr.bf16.gmra.mxu0 %v652
  %v688 = vpop.f32.mrf.mxu0
  %v689 = vadd.f32 0.0, %v688
  %v690 = vpop.f32.mrf.mxu0
  %v691 = vpop.f32.mrf.mxu0
  %v692 = vpop.f32.mrf.mxu0
  %693 = vdwg.mxu0
  %v694 = vadd.f32 %v153, %v689
  %v695 = vtanh.pop %v694
  %v696 = vxor.u32 %v694, 2147483648
  %v697 = vmul.f32 %v696, 1.442695
  %v698 = vpow.pop %v697
  %v699 = vadd.f32 %v698, 1.0
  %v700 = vrcp.pop %v699
  %v701 = vmul.f32 1.0, %v700
  %v702 = vsel %vm37, %v695, %v701
  %v703 = vmul.f32 %v702, %v634
  %705 = vrot.lane.b32.xlu0 %v702, 64
  %v706 = vpop.permute.xlu0 %705
  %v708 = vmul.f32 %v702, %v706
  %710 = vrot.lane.b32.xlu0 %v708, 32
  %v711 = vpop.permute.xlu0 %710
  %v713 = vadd.f32 %v703, %v711
  %v714 = vtanh.pop %v713
  %716 = vrot.lane.b32.xlu0 %v714, 64
  %v717 = vpop.permute.xlu0 %716
  %v719 = vmul.f32 %v702, %v717
  %v720 = vpack.c.bf16 %v719, %v719
  %v722 = vunpack.c.l.b16 %v720
  %v723 = vpack.c.b16 %v722, %v722
  %724 = vrot.lane.b32.xlu0 %v723, 32
  %v725 = vpop.permute.xlu0 %724
  %727 = vst.msk [vmem:[#allocation2 + $0x18] sm:$0xf] %vm252, %v725
  %728 = vrot.lane.b32.xlu0 %v720, 32
  %v729 = vpop.permute.xlu0 %728
  %v731 = vsel %vm175, %v729, 0
  %733 = vmatprep.subr.bf16.mxu0 0
  %734 = vmatpush1.bf16.msra.mxu0 0
  %735 = vmatprep.subr.bf16.mxu0 0
  %736 = vmatpush1.bf16.msra.mxu0 0
  %737 = vmatprep.subr.bf16.mxu0 0
  %738 = vmatpush1.bf16.msra.mxu0 0
  %739 = vmatprep.subr.bf16.mxu0 0
  %740 = vmatpush1.bf16.msra.mxu0 0
  %741 = vmatprep.subr.bf16.mxu0 0
  %742 = vmatpush1.bf16.msra.mxu0 0
  %743 = vmatprep.subr.bf16.mxu0 0
  %744 = vmatpush1.bf16.msra.mxu0 0
  %745 = vmatprep.subr.bf16.mxu0 0
  %746 = vmatpush1.bf16.msra.mxu0 %v172
  %747 = vmatprep.subr.bf16.mxu0 0
  %748 = vmatpush1.bf16.msra.mxu0 %v171
  %749 = vmatprep.subr.bf16.mxu0 0
  %750 = vmatpush2.bf16.msra.mxu0 0
  %751 = vmatprep.subr.bf16.mxu0 0
  %752 = vmatpush2.bf16.msra.mxu0 0
  %753 = vmatprep.subr.bf16.mxu0 0
  %754 = vmatpush2.bf16.msra.mxu0 0
  %755 = vmatprep.subr.bf16.mxu0 0
  %756 = vmatpush2.bf16.msra.mxu0 0
  %757 = vmatprep.subr.bf16.mxu0 0
  %758 = vmatpush2.bf16.msra.mxu0 0
  %759 = vmatprep.subr.bf16.mxu0 0
  %760 = vmatpush2.bf16.msra.mxu0 0
  %761 = vmatprep.subr.bf16.mxu0 0
  %762 = vmatpush2.bf16.msra.mxu0 0
  %763 = vmatprep.subr.bf16.mxu0 0
  %764 = vmatpush2.bf16.msra.mxu0 0
  %765 = vmatprep.mubr.bf16.mxu0 0
  %766 = vmatmul.mubr.bf16.gmra.mxu0 %v731
  %v767 = vpop.f32.mrf.mxu0
  %v768 = vadd.f32 0.0, %v767
  %v769 = vpop.f32.mrf.mxu0
  %v770 = vpop.f32.mrf.mxu0
  %v771 = vpop.f32.mrf.mxu0
  %772 = vdwg.mxu0
  %v773 = vadd.f32 %v156, %v768
  %v774 = vtanh.pop %v773
  %v775 = vxor.u32 %v773, 2147483648
  %v776 = vmul.f32 %v775, 1.442695
  %v777 = vpow.pop %v776
  %v778 = vadd.f32 %v777, 1.0
  %v779 = vrcp.pop %v778
  %v780 = vmul.f32 1.0, %v779
  %v781 = vsel %vm37, %v774, %v780
  %v782 = vmul.f32 %v781, %v713
  %784 = vrot.lane.b32.xlu0 %v781, 64
  %v785 = vpop.permute.xlu0 %784
  %v787 = vmul.f32 %v781, %v785
  %789 = vrot.lane.b32.xlu0 %v787, 32
  %v790 = vpop.permute.xlu0 %789
  %v792 = vadd.f32 %v782, %v790
  %v793 = vtanh.pop %v792
  %795 = vrot.lane.b32.xlu0 %v793, 64
  %v796 = vpop.permute.xlu0 %795
  %v798 = vmul.f32 %v781, %v796
  %v799 = vpack.c.bf16 %v798, %v798
  %v801 = vunpack.c.l.b16 %v799
  %v802 = vpack.c.b16 %v801, %v801
  %803 = vrot.lane.b32.xlu0 %v802, 32
  %v804 = vpop.permute.xlu0 %803
  %806 = vst.msk [vmem:[#allocation2 + $0x1c] sm:$0xf] %vm252, %v804
  %v807 = vld [vmem:[#allocation2] sm:$0xf]
  %v808 = vld [vmem:[#allocation2 + $0x4] sm:$0xf]
  %v809 = vld [vmem:[#allocation2 + $0x8] sm:$0xf]
  %v810 = vld [vmem:[#allocation2 + $0xc] sm:$0xf]
  %v811 = vld [vmem:[#allocation2 + $0x10] sm:$0xf]
  %v812 = vld [vmem:[#allocation2 + $0x14] sm:$0xf]
  %v813 = vld [vmem:[#allocation2 + $0x18] sm:$0xf]
  %v814 = vld [vmem:[#allocation2 + $0x1c] sm:$0xf]
  %v815 = vld [vmem:[%s4] sm:$0xf]
  %v816 = vld [vmem:[%s4 + $0x4] sm:$0xf]
  %v817 = vld [vmem:[%s4 + $0x8] sm:$0xf]
  %v818 = vld [vmem:[%s4 + $0xc] sm:$0xf]
  %v819 = vld [vmem:[%s6] sm:$0x1]
  %v821 = vlaneseq
  %v822 = vshrl.u32 %v821, 7
  %v823 = vsub.s32 0, %v822
  %v824 = vrot.slane %v819, %v823
  %v834 = vunpack.c.l.b16 %v807
  %v835 = vunpack.c.l.b16 %v808
  %v836 = vunpack.c.l.b16 %v809
  %v837 = vunpack.c.l.b16 %v810
  %v838 = vunpack.c.l.b16 %v811
  %v839 = vunpack.c.l.b16 %v812
  %v840 = vunpack.c.l.b16 %v813
  %v841 = vunpack.c.l.b16 %v814
  %v842 = vpack.c.b16 %v835, %v834
  %v843 = vpack.c.b16 %v837, %v836
  %v844 = vpack.c.b16 %v839, %v838
  %v845 = vpack.c.b16 %v841, %v840
  %v850 = vunpack.c.l.b16 %v815
  %v851 = vunpack.c.l.b16 %v816
  %v852 = vunpack.c.l.b16 %v817
  %v853 = vunpack.c.l.b16 %v818
  %v854 = vpack.c.b16 %v851, %v850
  %v855 = vpack.c.b16 %v853, %v852
  %v859 = vsel %vm175, %v842, 0
  %v862 = vsel %vm175, %v843, 0
  %v865 = vsel %vm175, %v844, 0
  %v868 = vsel %vm175, %v845, 0
  %870 = vmatprep.subr.bf16.mxu0 0
  %871 = vmatpush1.bf16.msra.mxu0 0
  %872 = vmatprep.subr.bf16.mxu0 0
  %873 = vmatpush1.bf16.msra.mxu0 0
  %874 = vmatprep.subr.bf16.mxu0 0
  %875 = vmatpush1.bf16.msra.mxu0 0
  %876 = vmatprep.subr.bf16.mxu0 0
  %877 = vmatpush1.bf16.msra.mxu0 0
  %878 = vmatprep.subr.bf16.mxu0 0
  %879 = vmatpush1.bf16.msra.mxu0 0
  %880 = vmatprep.subr.bf16.mxu0 0
  %881 = vmatpush1.bf16.msra.mxu0 0
  %882 = vmatprep.subr.bf16.mxu0 0
  %883 = vmatpush1.bf16.msra.mxu0 %v855
  %884 = vmatprep.subr.bf16.mxu0 0
  %885 = vmatpush1.bf16.msra.mxu0 %v854
  %886 = vmatprep.subr.bf16.mxu0 0
  %887 = vmatpush2.bf16.msra.mxu0 0
  %888 = vmatprep.subr.bf16.mxu0 0
  %889 = vmatpush2.bf16.msra.mxu0 0
  %890 = vmatprep.subr.bf16.mxu0 0
  %891 = vmatpush2.bf16.msra.mxu0 0
  %892 = vmatprep.subr.bf16.mxu0 0
  %893 = vmatpush2.bf16.msra.mxu0 0
  %894 = vmatprep.subr.bf16.mxu0 0
  %895 = vmatpush2.bf16.msra.mxu0 0
  %896 = vmatprep.subr.bf16.mxu0 0
  %897 = vmatpush2.bf16.msra.mxu0 0
  %898 = vmatprep.subr.bf16.mxu0 0
  %899 = vmatpush2.bf16.msra.mxu0 0
  %900 = vmatprep.subr.bf16.mxu0 0
  %901 = vmatpush2.bf16.msra.mxu0 0
  %902 = vmatprep.mubr.bf16.mxu0 0
  %903 = vmatmul.mubr.bf16.gmra.mxu0 %v859
  %v904 = vpop.f32.mrf.mxu0
  %v905 = vadd.f32 %v824, %v904
  %v906 = vpop.f32.mrf.mxu0
  %v907 = vpop.f32.mrf.mxu0
  %v908 = vadd.f32 %v824, %v907
  %v909 = vpop.f32.mrf.mxu0
  %910 = vmatprep.mubr.bf16.mxu0 0
  %911 = vmatmul.mubr.bf16.gmra.mxu0 %v862
  %v912 = vpop.f32.mrf.mxu0
  %v913 = vadd.f32 %v824, %v912
  %v914 = vpop.f32.mrf.mxu0
  %v915 = vpop.f32.mrf.mxu0
  %v916 = vadd.f32 %v824, %v915
  %v917 = vpop.f32.mrf.mxu0
  %918 = vmatprep.mubr.bf16.mxu0 0
  %919 = vmatmul.mubr.bf16.gmra.mxu0 %v865
  %v920 = vpop.f32.mrf.mxu0
  %v921 = vadd.f32 %v824, %v920
  %v922 = vpop.f32.mrf.mxu0
  %v923 = vpop.f32.mrf.mxu0
  %v924 = vadd.f32 %v824, %v923
  %v925 = vpop.f32.mrf.mxu0
  %926 = vmatprep.mubr.bf16.mxu0 0
  %927 = vmatmul.mubr.bf16.gmra.mxu0 %v868
  %v928 = vpop.f32.mrf.mxu0
  %v929 = vadd.f32 %v824, %v928
  %v930 = vpop.f32.mrf.mxu0
  %v931 = vpop.f32.mrf.mxu0
  %v932 = vadd.f32 %v824, %v931
  %v933 = vpop.f32.mrf.mxu0
  %934 = vdwg.mxu0
  %v935 = vld [vmem:[%s5] sm:$0xf]
  %v936 = vld [vmem:[%s5 + $0x4] sm:$0xf]
  %v937 = vld [vmem:[%s5 + $0x8] sm:$0xf]
  %v938 = vld [vmem:[%s5 + $0xc] sm:$0xf]
  %v943 = vunpack.c.l.b16 %v935
  %v944 = vunpack.c.l.b16 %v936
  %v945 = vunpack.c.l.b16 %v937
  %v946 = vunpack.c.l.b16 %v938
  %v947 = vpack.c.b16 %v944, %v943
  %v948 = vpack.c.b16 %v946, %v945
  %951 = vmatprep.subr.bf16.mxu0 0
  %952 = vmatpush1.bf16.msra.mxu0 0
  %953 = vmatprep.subr.bf16.mxu0 0
  %954 = vmatpush1.bf16.msra.mxu0 0
  %955 = vmatprep.subr.bf16.mxu0 0
  %956 = vmatpush1.bf16.msra.mxu0 0
  %957 = vmatprep.subr.bf16.mxu0 0
  %958 = vmatpush1.bf16.msra.mxu0 0
  %959 = vmatprep.subr.bf16.mxu0 0
  %960 = vmatpush1.bf16.msra.mxu0 0
  %961 = vmatprep.subr.bf16.mxu0 0
  %962 = vmatpush1.bf16.msra.mxu0 0
  %963 = vmatprep.subr.bf16.mxu0 0
  %964 = vmatpush1.bf16.msra.mxu0 %v948
  %965 = vmatprep.subr.bf16.mxu0 0
  %966 = vmatpush1.bf16.msra.mxu0 %v947
  %967 = vmatprep.subr.bf16.mxu0 0
  %968 = vmatpush2.bf16.msra.mxu0 0
  %969 = vmatprep.subr.bf16.mxu0 0
  %970 = vmatpush2.bf16.msra.mxu0 0
  %971 = vmatprep.subr.bf16.mxu0 0
  %972 = vmatpush2.bf16.msra.mxu0 0
  %973 = vmatprep.subr.bf16.mxu0 0
  %974 = vmatpush2.bf16.msra.mxu0 0
  %975 = vmatprep.subr.bf16.mxu0 0
  %976 = vmatpush2.bf16.msra.mxu0 0
  %977 = vmatprep.subr.bf16.mxu0 0
  %978 = vmatpush2.bf16.msra.mxu0 0
  %979 = vmatprep.subr.bf16.mxu0 0
  %980 = vmatpush2.bf16.msra.mxu0 0
  %981 = vmatprep.subr.bf16.mxu0 0
  %982 = vmatpush2.bf16.msra.mxu0 0
  %983 = vmatprep.mubr.bf16.mxu0 0
  %984 = vmatmul.mubr.bf16.gmra.mxu0 %v177
  %v985 = vpop.f32.mrf.mxu0
  %v986 = vadd.f32 0.0, %v985
  %v987 = vpop.f32.mrf.mxu0
  %v988 = vpop.f32.mrf.mxu0
  %v989 = vpop.f32.mrf.mxu0
  %990 = vdwg.mxu0
  %v991 = vadd.f32 %v905, %v986
  %v992 = vtanh.pop %v991
  %v993 = vxor.u32 %v991, 2147483648
  %v994 = vmul.f32 %v993, 1.442695
  %v995 = vpow.pop %v994
  %v996 = vadd.f32 %v995, 1.0
  %v997 = vrcp.pop %v996
  %v998 = vmul.f32 1.0, %v997
  %v999 = vsel %vm37, %v992, %v998
  %v1000 = vmul.f32 %v999, 0.0
  %1002 = vrot.lane.b32.xlu0 %v999, 64
  %v1003 = vpop.permute.xlu0 %1002
  %v1005 = vmul.f32 %v999, %v1003
  %1007 = vrot.lane.b32.xlu0 %v1005, 32
  %v1008 = vpop.permute.xlu0 %1007
  %v1010 = vadd.f32 %v1000, %v1008
  %v1011 = vtanh.pop %v1010
  %1013 = vrot.lane.b32.xlu0 %v1011, 64
  %v1014 = vpop.permute.xlu0 %1013
  %v1016 = vmul.f32 %v999, %v1014
  %v1017 = vpack.c.bf16 %v1016, %v1016
  %1019 = vrot.lane.b32.xlu0 %v1017, 32
  %v1020 = vpop.permute.xlu0 %1019
  %v1022 = vsel %vm175, %v1020, 0
  %1024 = vmatprep.subr.bf16.mxu0 0
  %1025 = vmatpush1.bf16.msra.mxu0 0
  %1026 = vmatprep.subr.bf16.mxu0 0
  %1027 = vmatpush1.bf16.msra.mxu0 0
  %1028 = vmatprep.subr.bf16.mxu0 0
  %1029 = vmatpush1.bf16.msra.mxu0 0
  %1030 = vmatprep.subr.bf16.mxu0 0
  %1031 = vmatpush1.bf16.msra.mxu0 0
  %1032 = vmatprep.subr.bf16.mxu0 0
  %1033 = vmatpush1.bf16.msra.mxu0 0
  %1034 = vmatprep.subr.bf16.mxu0 0
  %1035 = vmatpush1.bf16.msra.mxu0 0
  %1036 = vmatprep.subr.bf16.mxu0 0
  %1037 = vmatpush1.bf16.msra.mxu0 %v948
  %1038 = vmatprep.subr.bf16.mxu0 0
  %1039 = vmatpush1.bf16.msra.mxu0 %v947
  %1040 = vmatprep.subr.bf16.mxu0 0
  %1041 = vmatpush2.bf16.msra.mxu0 0
  %1042 = vmatprep.subr.bf16.mxu0 0
  %1043 = vmatpush2.bf16.msra.mxu0 0
  %1044 = vmatprep.subr.bf16.mxu0 0
  %1045 = vmatpush2.bf16.msra.mxu0 0
  %1046 = vmatprep.subr.bf16.mxu0 0
  %1047 = vmatpush2.bf16.msra.mxu0 0
  %1048 = vmatprep.subr.bf16.mxu0 0
  %1049 = vmatpush2.bf16.msra.mxu0 0
  %1050 = vmatprep.subr.bf16.mxu0 0
  %1051 = vmatpush2.bf16.msra.mxu0 0
  %1052 = vmatprep.subr.bf16.mxu0 0
  %1053 = vmatpush2.bf16.msra.mxu0 0
  %1054 = vmatprep.subr.bf16.mxu0 0
  %1055 = vmatpush2.bf16.msra.mxu0 0
  %1056 = vmatprep.mubr.bf16.mxu0 0
  %1057 = vmatmul.mubr.bf16.gmra.mxu0 %v1022
  %v1058 = vpop.f32.mrf.mxu0
  %v1059 = vadd.f32 0.0, %v1058
  %v1060 = vpop.f32.mrf.mxu0
  %v1061 = vpop.f32.mrf.mxu0
  %v1062 = vpop.f32.mrf.mxu0
  %1063 = vdwg.mxu0
  %v1064 = vadd.f32 %v908, %v1059
  %v1065 = vtanh.pop %v1064
  %v1066 = vxor.u32 %v1064, 2147483648
  %v1067 = vmul.f32 %v1066, 1.442695
  %v1068 = vpow.pop %v1067
  %v1069 = vadd.f32 %v1068, 1.0
  %v1070 = vrcp.pop %v1069
  %v1071 = vmul.f32 1.0, %v1070
  %v1072 = vsel %vm37, %v1065, %v1071
  %v1073 = vmul.f32 %v1072, %v1010
  %1075 = vrot.lane.b32.xlu0 %v1072, 64
  %v1076 = vpop.permute.xlu0 %1075
  %v1078 = vmul.f32 %v1072, %v1076
  %1080 = vrot.lane.b32.xlu0 %v1078, 32
  %v1081 = vpop.permute.xlu0 %1080
  %v1083 = vadd.f32 %v1073, %v1081
  %v1084 = vtanh.pop %v1083
  %1086 = vrot.lane.b32.xlu0 %v1084, 64
  %v1087 = vpop.permute.xlu0 %1086
  %v1089 = vmul.f32 %v1072, %v1087
  %v1090 = vpack.c.bf16 %v1089, %v1089
  %1092 = vrot.lane.b32.xlu0 %v1090, 32
  %v1093 = vpop.permute.xlu0 %1092
  %v1095 = vsel %vm175, %v1093, 0
  %1097 = vmatprep.subr.bf16.mxu0 0
  %1098 = vmatpush1.bf16.msra.mxu0 0
  %1099 = vmatprep.subr.bf16.mxu0 0
  %1100 = vmatpush1.bf16.msra.mxu0 0
  %1101 = vmatprep.subr.bf16.mxu0 0
  %1102 = vmatpush1.bf16.msra.mxu0 0
  %1103 = vmatprep.subr.bf16.mxu0 0
  %1104 = vmatpush1.bf16.msra.mxu0 0
  %1105 = vmatprep.subr.bf16.mxu0 0
  %1106 = vmatpush1.bf16.msra.mxu0 0
  %1107 = vmatprep.subr.bf16.mxu0 0
  %1108 = vmatpush1.bf16.msra.mxu0 0
  %1109 = vmatprep.subr.bf16.mxu0 0
  %1110 = vmatpush1.bf16.msra.mxu0 %v948
  %1111 = vmatprep.subr.bf16.mxu0 0
  %1112 = vmatpush1.bf16.msra.mxu0 %v947
  %1113 = vmatprep.subr.bf16.mxu0 0
  %1114 = vmatpush2.bf16.msra.mxu0 0
  %1115 = vmatprep.subr.bf16.mxu0 0
  %1116 = vmatpush2.bf16.msra.mxu0 0
  %1117 = vmatprep.subr.bf16.mxu0 0
  %1118 = vmatpush2.bf16.msra.mxu0 0
  %1119 = vmatprep.subr.bf16.mxu0 0
  %1120 = vmatpush2.bf16.msra.mxu0 0
  %1121 = vmatprep.subr.bf16.mxu0 0
  %1122 = vmatpush2.bf16.msra.mxu0 0
  %1123 = vmatprep.subr.bf16.mxu0 0
  %1124 = vmatpush2.bf16.msra.mxu0 0
  %1125 = vmatprep.subr.bf16.mxu0 0
  %1126 = vmatpush2.bf16.msra.mxu0 0
  %1127 = vmatprep.subr.bf16.mxu0 0
  %1128 = vmatpush2.bf16.msra.mxu0 0
  %1129 = vmatprep.mubr.bf16.mxu0 0
  %1130 = vmatmul.mubr.bf16.gmra.mxu0 %v1095
  %v1131 = vpop.f32.mrf.mxu0
  %v1132 = vadd.f32 0.0, %v1131
  %v1133 = vpop.f32.mrf.mxu0
  %v1134 = vpop.f32.mrf.mxu0
  %v1135 = vpop.f32.mrf.mxu0
  %1136 = vdwg.mxu0
  %v1137 = vadd.f32 %v913, %v1132
  %v1138 = vtanh.pop %v1137
  %v1139 = vxor.u32 %v1137, 2147483648
  %v1140 = vmul.f32 %v1139, 1.442695
  %v1141 = vpow.pop %v1140
  %v1142 = vadd.f32 %v1141, 1.0
  %v1143 = vrcp.pop %v1142
  %v1144 = vmul.f32 1.0, %v1143
  %v1145 = vsel %vm37, %v1138, %v1144
  %v1146 = vmul.f32 %v1145, %v1083
  %1148 = vrot.lane.b32.xlu0 %v1145, 64
  %v1149 = vpop.permute.xlu0 %1148
  %v1151 = vmul.f32 %v1145, %v1149
  %1153 = vrot.lane.b32.xlu0 %v1151, 32
  %v1154 = vpop.permute.xlu0 %1153
  %v1156 = vadd.f32 %v1146, %v1154
  %v1157 = vtanh.pop %v1156
  %1159 = vrot.lane.b32.xlu0 %v1157, 64
  %v1160 = vpop.permute.xlu0 %1159
  %v1162 = vmul.f32 %v1145, %v1160
  %v1163 = vpack.c.bf16 %v1162, %v1162
  %1165 = vrot.lane.b32.xlu0 %v1163, 32
  %v1166 = vpop.permute.xlu0 %1165
  %v1168 = vsel %vm175, %v1166, 0
  %1170 = vmatprep.subr.bf16.mxu0 0
  %1171 = vmatpush1.bf16.msra.mxu0 0
  %1172 = vmatprep.subr.bf16.mxu0 0
  %1173 = vmatpush1.bf16.msra.mxu0 0
  %1174 = vmatprep.subr.bf16.mxu0 0
  %1175 = vmatpush1.bf16.msra.mxu0 0
  %1176 = vmatprep.subr.bf16.mxu0 0
  %1177 = vmatpush1.bf16.msra.mxu0 0
  %1178 = vmatprep.subr.bf16.mxu0 0
  %1179 = vmatpush1.bf16.msra.mxu0 0
  %1180 = vmatprep.subr.bf16.mxu0 0
  %1181 = vmatpush1.bf16.msra.mxu0 0
  %1182 = vmatprep.subr.bf16.mxu0 0
  %1183 = vmatpush1.bf16.msra.mxu0 %v948
  %1184 = vmatprep.subr.bf16.mxu0 0
  %1185 = vmatpush1.bf16.msra.mxu0 %v947
  %1186 = vmatprep.subr.bf16.mxu0 0
  %1187 = vmatpush2.bf16.msra.mxu0 0
  %1188 = vmatprep.subr.bf16.mxu0 0
  %1189 = vmatpush2.bf16.msra.mxu0 0
  %1190 = vmatprep.subr.bf16.mxu0 0
  %1191 = vmatpush2.bf16.msra.mxu0 0
  %1192 = vmatprep.subr.bf16.mxu0 0
  %1193 = vmatpush2.bf16.msra.mxu0 0
  %1194 = vmatprep.subr.bf16.mxu0 0
  %1195 = vmatpush2.bf16.msra.mxu0 0
  %1196 = vmatprep.subr.bf16.mxu0 0
  %1197 = vmatpush2.bf16.msra.mxu0 0
  %1198 = vmatprep.subr.bf16.mxu0 0
  %1199 = vmatpush2.bf16.msra.mxu0 0
  %1200 = vmatprep.subr.bf16.mxu0 0
  %1201 = vmatpush2.bf16.msra.mxu0 0
  %1202 = vmatprep.mubr.bf16.mxu0 0
  %1203 = vmatmul.mubr.bf16.gmra.mxu0 %v1168
  %v1204 = vpop.f32.mrf.mxu0
  %v1205 = vadd.f32 0.0, %v1204
  %v1206 = vpop.f32.mrf.mxu0
  %v1207 = vpop.f32.mrf.mxu0
  %v1208 = vpop.f32.mrf.mxu0
  %1209 = vdwg.mxu0
  %v1210 = vadd.f32 %v916, %v1205
  %v1211 = vtanh.pop %v1210
  %v1212 = vxor.u32 %v1210, 2147483648
  %v1213 = vmul.f32 %v1212, 1.442695
  %v1214 = vpow.pop %v1213
  %v1215 = vadd.f32 %v1214, 1.0
  %v1216 = vrcp.pop %v1215
  %v1217 = vmul.f32 1.0, %v1216
  %v1218 = vsel %vm37, %v1211, %v1217
  %v1219 = vmul.f32 %v1218, %v1156
  %1221 = vrot.lane.b32.xlu0 %v1218, 64
  %v1222 = vpop.permute.xlu0 %1221
  %v1224 = vmul.f32 %v1218, %v1222
  %1226 = vrot.lane.b32.xlu0 %v1224, 32
  %v1227 = vpop.permute.xlu0 %1226
  %v1229 = vadd.f32 %v1219, %v1227
  %v1230 = vtanh.pop %v1229
  %1232 = vrot.lane.b32.xlu0 %v1230, 64
  %v1233 = vpop.permute.xlu0 %1232
  %v1235 = vmul.f32 %v1218, %v1233
  %v1236 = vpack.c.bf16 %v1235, %v1235
  %1238 = vrot.lane.b32.xlu0 %v1236, 32
  %v1239 = vpop.permute.xlu0 %1238
  %v1241 = vsel %vm175, %v1239, 0
  %1243 = vmatprep.subr.bf16.mxu0 0
  %1244 = vmatpush1.bf16.msra.mxu0 0
  %1245 = vmatprep.subr.bf16.mxu0 0
  %1246 = vmatpush1.bf16.msra.mxu0 0
  %1247 = vmatprep.subr.bf16.mxu0 0
  %1248 = vmatpush1.bf16.msra.mxu0 0
  %1249 = vmatprep.subr.bf16.mxu0 0
  %1250 = vmatpush1.bf16.msra.mxu0 0
  %1251 = vmatprep.subr.bf16.mxu0 0
  %1252 = vmatpush1.bf16.msra.mxu0 0
  %1253 = vmatprep.subr.bf16.mxu0 0
  %1254 = vmatpush1.bf16.msra.mxu0 0
  %1255 = vmatprep.subr.bf16.mxu0 0
  %1256 = vmatpush1.bf16.msra.mxu0 %v948
  %1257 = vmatprep.subr.bf16.mxu0 0
  %1258 = vmatpush1.bf16.msra.mxu0 %v947
  %1259 = vmatprep.subr.bf16.mxu0 0
  %1260 = vmatpush2.bf16.msra.mxu0 0
  %1261 = vmatprep.subr.bf16.mxu0 0
  %1262 = vmatpush2.bf16.msra.mxu0 0
  %1263 = vmatprep.subr.bf16.mxu0 0
  %1264 = vmatpush2.bf16.msra.mxu0 0
  %1265 = vmatprep.subr.bf16.mxu0 0
  %1266 = vmatpush2.bf16.msra.mxu0 0
  %1267 = vmatprep.subr.bf16.mxu0 0
  %1268 = vmatpush2.bf16.msra.mxu0 0
  %1269 = vmatprep.subr.bf16.mxu0 0
  %1270 = vmatpush2.bf16.msra.mxu0 0
  %1271 = vmatprep.subr.bf16.mxu0 0
  %1272 = vmatpush2.bf16.msra.mxu0 0
  %1273 = vmatprep.subr.bf16.mxu0 0
  %1274 = vmatpush2.bf16.msra.mxu0 0
  %1275 = vmatprep.mubr.bf16.mxu0 0
  %1276 = vmatmul.mubr.bf16.gmra.mxu0 %v1241
  %v1277 = vpop.f32.mrf.mxu0
  %v1278 = vadd.f32 0.0, %v1277
  %v1279 = vpop.f32.mrf.mxu0
  %v1280 = vpop.f32.mrf.mxu0
  %v1281 = vpop.f32.mrf.mxu0
  %1282 = vdwg.mxu0
  %v1283 = vadd.f32 %v921, %v1278
  %v1284 = vtanh.pop %v1283
  %v1285 = vxor.u32 %v1283, 2147483648
  %v1286 = vmul.f32 %v1285, 1.442695
  %v1287 = vpow.pop %v1286
  %v1288 = vadd.f32 %v1287, 1.0
  %v1289 = vrcp.pop %v1288
  %v1290 = vmul.f32 1.0, %v1289
  %v1291 = vsel %vm37, %v1284, %v1290
  %v1292 = vmul.f32 %v1291, %v1229
  %1294 = vrot.lane.b32.xlu0 %v1291, 64
  %v1295 = vpop.permute.xlu0 %1294
  %v1297 = vmul.f32 %v1291, %v1295
  %1299 = vrot.lane.b32.xlu0 %v1297, 32
  %v1300 = vpop.permute.xlu0 %1299
  %v1302 = vadd.f32 %v1292, %v1300
  %v1303 = vtanh.pop %v1302
  %1305 = vrot.lane.b32.xlu0 %v1303, 64
  %v1306 = vpop.permute.xlu0 %1305
  %v1308 = vmul.f32 %v1291, %v1306
  %v1309 = vpack.c.bf16 %v1308, %v1308
  %1311 = vrot.lane.b32.xlu0 %v1309, 32
  %v1312 = vpop.permute.xlu0 %1311
  %v1314 = vsel %vm175, %v1312, 0
  %1316 = vmatprep.subr.bf16.mxu0 0
  %1317 = vmatpush1.bf16.msra.mxu0 0
  %1318 = vmatprep.subr.bf16.mxu0 0
  %1319 = vmatpush1.bf16.msra.mxu0 0
  %1320 = vmatprep.subr.bf16.mxu0 0
  %1321 = vmatpush1.bf16.msra.mxu0 0
  %1322 = vmatprep.subr.bf16.mxu0 0
  %1323 = vmatpush1.bf16.msra.mxu0 0
  %1324 = vmatprep.subr.bf16.mxu0 0
  %1325 = vmatpush1.bf16.msra.mxu0 0
  %1326 = vmatprep.subr.bf16.mxu0 0
  %1327 = vmatpush1.bf16.msra.mxu0 0
  %1328 = vmatprep.subr.bf16.mxu0 0
  %1329 = vmatpush1.bf16.msra.mxu0 %v948
  %1330 = vmatprep.subr.bf16.mxu0 0
  %1331 = vmatpush1.bf16.msra.mxu0 %v947
  %1332 = vmatprep.subr.bf16.mxu0 0
  %1333 = vmatpush2.bf16.msra.mxu0 0
  %1334 = vmatprep.subr.bf16.mxu0 0
  %1335 = vmatpush2.bf16.msra.mxu0 0
  %1336 = vmatprep.subr.bf16.mxu0 0
  %1337 = vmatpush2.bf16.msra.mxu0 0
  %1338 = vmatprep.subr.bf16.mxu0 0
  %1339 = vmatpush2.bf16.msra.mxu0 0
  %1340 = vmatprep.subr.bf16.mxu0 0
  %1341 = vmatpush2.bf16.msra.mxu0 0
  %1342 = vmatprep.subr.bf16.mxu0 0
  %1343 = vmatpush2.bf16.msra.mxu0 0
  %1344 = vmatprep.subr.bf16.mxu0 0
  %1345 = vmatpush2.bf16.msra.mxu0 0
  %1346 = vmatprep.subr.bf16.mxu0 0
  %1347 = vmatpush2.bf16.msra.mxu0 0
  %1348 = vmatprep.mubr.bf16.mxu0 0
  %1349 = vmatmul.mubr.bf16.gmra.mxu0 %v1314
  %v1350 = vpop.f32.mrf.mxu0
  %v1351 = vadd.f32 0.0, %v1350
  %v1352 = vpop.f32.mrf.mxu0
  %v1353 = vpop.f32.mrf.mxu0
  %v1354 = vpop.f32.mrf.mxu0
  %1355 = vdwg.mxu0
  %v1356 = vadd.f32 %v924, %v1351
  %v1357 = vtanh.pop %v1356
  %v1358 = vxor.u32 %v1356, 2147483648
  %v1359 = vmul.f32 %v1358, 1.442695
  %v1360 = vpow.pop %v1359
  %v1361 = vadd.f32 %v1360, 1.0
  %v1362 = vrcp.pop %v1361
  %v1363 = vmul.f32 1.0, %v1362
  %v1364 = vsel %vm37, %v1357, %v1363
  %v1365 = vmul.f32 %v1364, %v1302
  %1367 = vrot.lane.b32.xlu0 %v1364, 64
  %v1368 = vpop.permute.xlu0 %1367
  %v1370 = vmul.f32 %v1364, %v1368
  %1372 = vrot.lane.b32.xlu0 %v1370, 32
  %v1373 = vpop.permute.xlu0 %1372
  %v1375 = vadd.f32 %v1365, %v1373
  %v1376 = vtanh.pop %v1375
  %1378 = vrot.lane.b32.xlu0 %v1376, 64
  %v1379 = vpop.permute.xlu0 %1378
  %v1381 = vmul.f32 %v1364, %v1379
  %v1382 = vpack.c.bf16 %v1381, %v1381
  %1384 = vrot.lane.b32.xlu0 %v1382, 32
  %v1385 = vpop.permute.xlu0 %1384
  %v1387 = vsel %vm175, %v1385, 0
  %1389 = vmatprep.subr.bf16.mxu0 0
  %1390 = vmatpush1.bf16.msra.mxu0 0
  %1391 = vmatprep.subr.bf16.mxu0 0
  %1392 = vmatpush1.bf16.msra.mxu0 0
  %1393 = vmatprep.subr.bf16.mxu0 0
  %1394 = vmatpush1.bf16.msra.mxu0 0
  %1395 = vmatprep.subr.bf16.mxu0 0
  %1396 = vmatpush1.bf16.msra.mxu0 0
  %1397 = vmatprep.subr.bf16.mxu0 0
  %1398 = vmatpush1.bf16.msra.mxu0 0
  %1399 = vmatprep.subr.bf16.mxu0 0
  %1400 = vmatpush1.bf16.msra.mxu0 0
  %1401 = vmatprep.subr.bf16.mxu0 0
  %1402 = vmatpush1.bf16.msra.mxu0 %v948
  %1403 = vmatprep.subr.bf16.mxu0 0
  %1404 = vmatpush1.bf16.msra.mxu0 %v947
  %1405 = vmatprep.subr.bf16.mxu0 0
  %1406 = vmatpush2.bf16.msra.mxu0 0
  %1407 = vmatprep.subr.bf16.mxu0 0
  %1408 = vmatpush2.bf16.msra.mxu0 0
  %1409 = vmatprep.subr.bf16.mxu0 0
  %1410 = vmatpush2.bf16.msra.mxu0 0
  %1411 = vmatprep.subr.bf16.mxu0 0
  %1412 = vmatpush2.bf16.msra.mxu0 0
  %1413 = vmatprep.subr.bf16.mxu0 0
  %1414 = vmatpush2.bf16.msra.mxu0 0
  %1415 = vmatprep.subr.bf16.mxu0 0
  %1416 = vmatpush2.bf16.msra.mxu0 0
  %1417 = vmatprep.subr.bf16.mxu0 0
  %1418 = vmatpush2.bf16.msra.mxu0 0
  %1419 = vmatprep.subr.bf16.mxu0 0
  %1420 = vmatpush2.bf16.msra.mxu0 0
  %1421 = vmatprep.mubr.bf16.mxu0 0
  %1422 = vmatmul.mubr.bf16.gmra.mxu0 %v1387
  %v1423 = vpop.f32.mrf.mxu0
  %v1424 = vadd.f32 0.0, %v1423
  %v1425 = vpop.f32.mrf.mxu0
  %v1426 = vpop.f32.mrf.mxu0
  %v1427 = vpop.f32.mrf.mxu0
  %1428 = vdwg.mxu0
  %v1429 = vadd.f32 %v929, %v1424
  %v1430 = vtanh.pop %v1429
  %v1431 = vxor.u32 %v1429, 2147483648
  %v1432 = vmul.f32 %v1431, 1.442695
  %v1433 = vpow.pop %v1432
  %v1434 = vadd.f32 %v1433, 1.0
  %v1435 = vrcp.pop %v1434
  %v1436 = vmul.f32 1.0, %v1435
  %v1437 = vsel %vm37, %v1430, %v1436
  %v1438 = vmul.f32 %v1437, %v1375
  %1440 = vrot.lane.b32.xlu0 %v1437, 64
  %v1441 = vpop.permute.xlu0 %1440
  %v1443 = vmul.f32 %v1437, %v1441
  %1445 = vrot.lane.b32.xlu0 %v1443, 32
  %v1446 = vpop.permute.xlu0 %1445
  %v1448 = vadd.f32 %v1438, %v1446
  %v1449 = vtanh.pop %v1448
  %1451 = vrot.lane.b32.xlu0 %v1449, 64
  %v1452 = vpop.permute.xlu0 %1451
  %v1454 = vmul.f32 %v1437, %v1452
  %v1455 = vpack.c.bf16 %v1454, %v1454
  %1457 = vrot.lane.b32.xlu0 %v1455, 32
  %v1458 = vpop.permute.xlu0 %1457
  %v1460 = vsel %vm175, %v1458, 0
  %1462 = vmatprep.subr.bf16.mxu0 0
  %1463 = vmatpush1.bf16.msra.mxu0 0
  %1464 = vmatprep.subr.bf16.mxu0 0
  %1465 = vmatpush1.bf16.msra.mxu0 0
  %1466 = vmatprep.subr.bf16.mxu0 0
  %1467 = vmatpush1.bf16.msra.mxu0 0
  %1468 = vmatprep.subr.bf16.mxu0 0
  %1469 = vmatpush1.bf16.msra.mxu0 0
  %1470 = vmatprep.subr.bf16.mxu0 0
  %1471 = vmatpush1.bf16.msra.mxu0 0
  %1472 = vmatprep.subr.bf16.mxu0 0
  %1473 = vmatpush1.bf16.msra.mxu0 0
  %1474 = vmatprep.subr.bf16.mxu0 0
  %1475 = vmatpush1.bf16.msra.mxu0 %v948
  %1476 = vmatprep.subr.bf16.mxu0 0
  %1477 = vmatpush1.bf16.msra.mxu0 %v947
  %1478 = vmatprep.subr.bf16.mxu0 0
  %1479 = vmatpush2.bf16.msra.mxu0 0
  %1480 = vmatprep.subr.bf16.mxu0 0
  %1481 = vmatpush2.bf16.msra.mxu0 0
  %1482 = vmatprep.subr.bf16.mxu0 0
  %1483 = vmatpush2.bf16.msra.mxu0 0
  %1484 = vmatprep.subr.bf16.mxu0 0
  %1485 = vmatpush2.bf16.msra.mxu0 0
  %1486 = vmatprep.subr.bf16.mxu0 0
  %1487 = vmatpush2.bf16.msra.mxu0 0
  %1488 = vmatprep.subr.bf16.mxu0 0
  %1489 = vmatpush2.bf16.msra.mxu0 0
  %1490 = vmatprep.subr.bf16.mxu0 0
  %1491 = vmatpush2.bf16.msra.mxu0 0
  %1492 = vmatprep.subr.bf16.mxu0 0
  %1493 = vmatpush2.bf16.msra.mxu0 0
  %1494 = vmatprep.mubr.bf16.mxu0 0
  %1495 = vmatmul.mubr.bf16.gmra.mxu0 %v1460
  %v1496 = vpop.f32.mrf.mxu0
  %v1497 = vadd.f32 0.0, %v1496
  %v1498 = vpop.f32.mrf.mxu0
  %v1499 = vpop.f32.mrf.mxu0
  %v1500 = vpop.f32.mrf.mxu0
  %1501 = vdwg.mxu0
  %v1502 = vadd.f32 %v932, %v1497
  %v1503 = vtanh.pop %v1502
  %v1504 = vxor.u32 %v1502, 2147483648
  %v1505 = vmul.f32 %v1504, 1.442695
  %v1506 = vpow.pop %v1505
  %v1507 = vadd.f32 %v1506, 1.0
  %v1508 = vrcp.pop %v1507
  %v1509 = vmul.f32 1.0, %v1508
  %v1510 = vsel %vm37, %v1503, %v1509
  %v1511 = vmul.f32 %v1510, %v1448
  %1513 = vrot.lane.b32.xlu0 %v1510, 64
  %v1514 = vpop.permute.xlu0 %1513
  %v1516 = vmul.f32 %v1510, %v1514
  %1518 = vrot.lane.b32.xlu0 %v1516, 32
  %v1519 = vpop.permute.xlu0 %1518
  %v1521 = vadd.f32 %v1511, %v1519
  %v1522 = vtanh.pop %v1521
  %1524 = vrot.lane.b32.xlu0 %v1522, 64
  %v1525 = vpop.permute.xlu0 %1524
  %v1527 = vmul.f32 %v1510, %v1525
  %v1528 = vpack.c.bf16 %v1527, %v1527
  %v1529 = vld [vmem:[%s7] sm:$0xf]
  %v1530 = vld [vmem:[%s7 + $0x4] sm:$0xf]
  %v1531 = vld [vmem:[%s7 + $0x8] sm:$0xf]
  %v1532 = vld [vmem:[%s7 + $0xc] sm:$0xf]
  %v1533 = vld [vmem:[%s8] sm:$0x1]
  %v1535 = vlaneseq
  %v1536 = vshrl.u32 %v1535, 7
  %v1537 = vsub.s32 0, %v1536
  %v1538 = vrot.slane %v1533, %v1537
  %1541 = vrot.lane.b32.xlu0 %v1528, 32
  %v1542 = vpop.permute.xlu0 %1541
  %v1547 = vunpack.c.l.b16 %v1529
  %v1548 = vunpack.c.l.b16 %v1530
  %v1549 = vunpack.c.l.b16 %v1531
  %v1550 = vunpack.c.l.b16 %v1532
  %v1551 = vpack.c.b16 %v1548, %v1547
  %v1552 = vpack.c.b16 %v1550, %v1549
  %v1556 = vsel %vm175, %v1542, 0
  %1558 = vmatprep.subr.bf16.mxu0 0
  %1559 = vmatpush1.bf16.msra.mxu0 0
  %1560 = vmatprep.subr.bf16.mxu0 0
  %1561 = vmatpush1.bf16.msra.mxu0 0
  %1562 = vmatprep.subr.bf16.mxu0 0
  %1563 = vmatpush1.bf16.msra.mxu0 0
  %1564 = vmatprep.subr.bf16.mxu0 0
  %1565 = vmatpush1.bf16.msra.mxu0 0
  %1566 = vmatprep.subr.bf16.mxu0 0
  %1567 = vmatpush1.bf16.msra.mxu0 0
  %1568 = vmatprep.subr.bf16.mxu0 0
  %1569 = vmatpush1.bf16.msra.mxu0 0
  %1570 = vmatprep.subr.bf16.mxu0 0
  %1571 = vmatpush1.bf16.msra.mxu0 %v1552
  %1572 = vmatprep.subr.bf16.mxu0 0
  %1573 = vmatpush1.bf16.msra.mxu0 %v1551
  %1574 = vmatprep.subr.bf16.mxu0 0
  %1575 = vmatpush2.bf16.msra.mxu0 0
  %1576 = vmatprep.subr.bf16.mxu0 0
  %1577 = vmatpush2.bf16.msra.mxu0 0
  %1578 = vmatprep.subr.bf16.mxu0 0
  %1579 = vmatpush2.bf16.msra.mxu0 0
  %1580 = vmatprep.subr.bf16.mxu0 0
  %1581 = vmatpush2.bf16.msra.mxu0 0
  %1582 = vmatprep.subr.bf16.mxu0 0
  %1583 = vmatpush2.bf16.msra.mxu0 0
  %1584 = vmatprep.subr.bf16.mxu0 0
  %1585 = vmatpush2.bf16.msra.mxu0 0
  %1586 = vmatprep.subr.bf16.mxu0 0
  %1587 = vmatpush2.bf16.msra.mxu0 0
  %1588 = vmatprep.subr.bf16.mxu0 0
  %1589 = vmatpush2.bf16.msra.mxu0 0
  %1590 = vmatprep.mubr.bf16.mxu0 0
  %1591 = vmatmul.mubr.bf16.gmra.mxu0 %v1556
  %v1592 = vpop.f32.mrf.mxu0
  %v1593 = vadd.f32 %v1538, %v1592
  %v1594 = vpop.f32.mrf.mxu0
  %v1595 = vpop.f32.mrf.mxu0
  %v1596 = vpop.f32.mrf.mxu0
  %1597 = vdwg.mxu0
  %1598 = vst [vmem:[%s9] sm:$0xff] %v1593
  // Predicated region
  $region38: #{lstm_model_forward.1} parent=0 // pred_check
    _
  $region39: #{lstm_model_forward.1} parent=0 // pred_check_branch
    %1600 = sbr.rel (0) target = $region41
  $region40: #{lstm_model_forward.1} parent=0 // pred_region
    _
  $region41: #{lstm_model_forward.1} parent=0 // pred_fallthru
    _
  // Predicated region
  $region42: #{lstm_model_forward.1} parent=0 // pred_check
    _
  $region43: #{lstm_model_forward.1} parent=0 // pred_check_branch
    %1602 = sbr.rel (0) target = $region45
  $region44: #{lstm_model_forward.1} parent=0 // pred_region
    _
  $region45: #{lstm_model_forward.1} parent=0 // pred_fallthru
    _

</llo_original>
